<compile_context>
chip_gen: v6e
topology: v6e:2x2x1
jax: 0.10.0
libtpu: 0.0.40
codegen_flags: <defaults>
</compile_context>

<pallas_src>
import jax
import jax.numpy as jnp
from jax.experimental import pallas as pl
from jax.experimental.pallas import tpu as pltpu

_BN_EPS = 1e-5


def _fold_bn(gamma, beta, mean, var, eps=_BN_EPS):
    """Fold BN running stats into per-channel (scale, bias)."""
    scale = (gamma / jnp.sqrt(var + eps)).astype(jnp.float32)
    bias = (beta - mean * scale).astype(jnp.float32)
    return scale, bias.reshape(1, -1)


def _make_basic_block_kernel(HoWo, Ho, Wo, P, has_shortcut, emit_preact):
    """conv3x3(bn1 scale folded)+relu -> conv3x3(bn2) -> +shortcut -> relu."""

    def kernel(p_ref, w1_ref, b1_ref, w2_ref, b2_ref, *rest):
        if has_shortcut:
            xs_ref, wsc_ref, bsc_ref = rest[0], rest[1], rest[2]
            outs = rest[3:]
        else:
            xs_ref = rest[0]
            outs = rest[1:]
        out_ref = outs[0]

        # ---- conv1: one MXU matmul, K = 9*Cin (im2col built in wrapper) ----
        acc1 = jnp.dot(p_ref[0], w1_ref[...],
                       preferred_element_type=jnp.float32)          # (HoWo, P)
        out1 = jnp.maximum(acc1 + b1_ref[...], 0.0)                  # bn1 + relu

        # ---- zero-pad conv2 input as a value (no scratch memset) ----
        o1 = out1.reshape(Ho, Wo, P)                                 # f32
        zc = jnp.zeros((Ho, 1, P), jnp.float32)
        o1 = jnp.concatenate([zc, o1, zc], axis=1)                   # (Ho, Wo+2, P)
        zr = jnp.zeros((1, Wo + 2, P), jnp.float32)
        xp = jnp.concatenate([zr, o1, zr], axis=0)                   # (Ho+2, Wo+2, P)

        # ---- conv2: 3 matmuls, dx taps packed into K = 3*P ----
        acc2 = None
        for dy in range(3):
            row = xp[dy:dy + Ho]                                     # (Ho, Wo+2, P)
            lhs = jnp.concatenate(
                [row[:, 0:Wo], row[:, 1:Wo + 1], row[:, 2:Wo + 2]],
                axis=-1).reshape(HoWo, 3 * P).astype(jnp.bfloat16)
            part = jnp.dot(lhs, w2_ref[dy],
                           preferred_element_type=jnp.float32)
            acc2 = part if acc2 is None else acc2 + part
        out2 = acc2 + b2_ref[...]                                    # bn2 (no relu)

        # ---- shortcut ----
        if has_shortcut:
            sc = jnp.dot(xs_ref[0], wsc_ref[...],
                         preferred_element_type=jnp.float32) + bsc_ref[...]
        else:
            sc = xs_ref[0]                                           # identity (f32)

        preact = out2 + sc
        out_ref[0] = jnp.maximum(preact, 0.0)
        if emit_preact:
            outs[1][0] = preact

    return kernel


def basic_block_forward(x_nchw, params, stride=1, is_last=False):
    """BasicBlock forward. x_nchw: (N, Cin, H, W) float32 (PyTorch layout)."""
    N, Cin, H, W = x_nchw.shape
    P = params["w1"].shape[0]                      # conv weights in OIHW
    has_shortcut = (stride != 1) or (Cin != P)
    Ho = (H - 1) // stride + 1
    Wo = (W - 1) // stride + 1
    HoWo = Ho * Wo
    span_h = (Ho - 1) * stride + 1
    span_w = (Wo - 1) * stride + 1

    # ---- wrapper-side glue (plain XLA): layout, im2col, BN folding ----
    x = jnp.transpose(x_nchw, (0, 2, 3, 1)).astype(jnp.float32)      # NHWC
    x_pad = jnp.pad(x, ((0, 0), (1, 1), (1, 1), (0, 0)))

    cols = []
    for dy in range(3):
        for dx in range(3):
            cols.append(x_pad[:, dy:dy + span_h:stride, dx:dx + span_w:stride, :])
    patches = jnp.concatenate(cols, axis=-1).reshape(N, HoWo, 9 * Cin)
    patches = patches.astype(jnp.bfloat16)

    s1, b1 = _fold_bn(*params["bn1"])
    s2, b2 = _fold_bn(*params["bn2"])
    w1 = jnp.transpose(params["w1"], (2, 3, 1, 0)).astype(jnp.float32)   # HWIO
    w2 = jnp.transpose(params["w2"], (2, 3, 1, 0)).astype(jnp.float32)
    w1 = (w1 * s1).reshape(9 * Cin, P).astype(jnp.bfloat16)              # (9*Cin, P)
    w2 = (w2 * s2).reshape(3, 3 * P, P).astype(jnp.bfloat16)             # (3, 3*P, P)

    inputs = [patches, w1, b1, w2, b2]
    in_specs = [
        pl.BlockSpec((1, HoWo, 9 * Cin), lambda b: (b, 0, 0)),
        pl.BlockSpec((9 * Cin, P), lambda b: (0, 0)),
        pl.BlockSpec((1, P), lambda b: (0, 0)),
        pl.BlockSpec((3, 3 * P, P), lambda b: (0, 0, 0)),
        pl.BlockSpec((1, P), lambda b: (0, 0)),
    ]

    if has_shortcut:
        xs = x[:, 0:span_h:stride, 0:span_w:stride, :].reshape(N, HoWo, Cin)
        xs = xs.astype(jnp.bfloat16)
        ssc, bsc = _fold_bn(*params["bnsc"])
        wsc = jnp.transpose(params["wsc"].reshape(P, Cin), (1, 0)).astype(jnp.float32)
        wsc = (wsc * ssc).astype(jnp.bfloat16)
        inputs += [xs, wsc, bsc]
        in_specs += [
            pl.BlockSpec((1, HoWo, Cin), lambda b: (b, 0, 0)),
            pl.BlockSpec((Cin, P), lambda b: (0, 0)),
            pl.BlockSpec((1, P), lambda b: (0, 0)),
        ]
    else:
        xs = x.reshape(N, HoWo, P)                # identity shortcut: add in f32
        inputs += [xs]
        in_specs += [pl.BlockSpec((1, HoWo, P), lambda b: (b, 0, 0))]

    n_out = 2 if is_last else 1                   # preact output only when needed
    out_shape = [jax.ShapeDtypeStruct((N, HoWo, P), jnp.float32)] * n_out
    out_specs = [pl.BlockSpec((1, HoWo, P), lambda b: (b, 0, 0))] * n_out

    flops = 2 * N * HoWo * (9 * Cin * P + 9 * P * P)
    if has_shortcut:
        flops += 2 * N * HoWo * Cin * P
    bytes_accessed = (sum(int(a.size) * a.dtype.itemsize for a in inputs)
                      + n_out * N * HoWo * P * 4)

    kernel = _make_basic_block_kernel(HoWo, Ho, Wo, P, has_shortcut, is_last)
    results = pl.pallas_call(
        kernel,
        grid=(N,),
        in_specs=in_specs,
        out_specs=out_specs,
        out_shape=out_shape,
        compiler_params=pltpu.CompilerParams(
            dimension_semantics=("parallel",)),
        cost_estimate=pl.CostEstimate(flops=flops, transcendentals=0,
                                      bytes_accessed=bytes_accessed),
    )(*inputs)

    out_nchw = jnp.transpose(results[0].reshape(N, Ho, Wo, P), (0, 3, 1, 2))
    if is_last:
        pre_nchw = jnp.transpose(results[1].reshape(N, Ho, Wo, P), (0, 3, 1, 2))
        return out_nchw, pre_nchw
    return out_nchw


# ---------------- pure-JAX reference (for correctness check) ----------------
def _ref_forward(x_nchw, params, stride, is_last):
    def conv(x, w_oihw, s, pad):
        return jax.lax.conv_general_dilated(
            x, w_oihw, window_strides=(s, s), padding=[(pad, pad), (pad, pad)],
            dimension_numbers=("NCHW", "OIHW", "NCHW"))

    def bn(x, g, b, m, v, eps=_BN_EPS):
        rs = lambda a: a.reshape(1, -1, 1, 1)
        return (x - rs(m)) / jnp.sqrt(rs(v) + eps) * rs(g) + rs(b)

    Cin, P = x_nchw.shape[1], params["w1"].shape[0]
    out = jax.nn.relu(bn(conv(x_nchw, params["w1"], stride, 1), *params["bn1"]))
    out = bn(conv(out, params["w2"], 1, 1), *params["bn2"])
    if stride != 1 or Cin != P:
        sc = bn(conv(x_nchw, params["wsc"], stride, 0), *params["bnsc"])
    else:
        sc = x_nchw
    preact = out + sc
    out = jax.nn.relu(preact)
    return (out, preact) if is_last else out


if __name__ == "__main__":
    key = jax.random.PRNGKey(0)

    def bn_params(k, c):
        k1, k2, k3, k4 = jax.random.split(k, 4)
        gamma = 1.0 + 0.1 * jax.random.normal(k1, (c,), jnp.float32)
        beta = 0.1 * jax.random.normal(k2, (c,), jnp.float32)
        mean = 0.1 * jax.random.normal(k3, (c,), jnp.float32)
        var = 0.5 + jnp.abs(jax.random.normal(k4, (c,), jnp.float32))
        return (gamma, beta, mean, var)

    def make_params(k, cin, p, has_sc):
        ks = jax.random.split(k, 6)
        prm = {
            "w1": 0.1 * jax.random.normal(ks[0], (p, cin, 3, 3), jnp.float32),
            "bn1": bn_params(ks[1], p),
            "w2": 0.1 * jax.random.normal(ks[2], (p, p, 3, 3), jnp.float32),
            "bn2": bn_params(ks[3], p),
        }
        if has_sc:
            prm["wsc"] = 0.1 * jax.random.normal(ks[4], (p, cin, 1, 1), jnp.float32)
            prm["bnsc"] = bn_params(ks[5], p)
        return prm

    configs = [
        # (N, Cin, H, W, planes, stride, is_last)
        (2, 4, 16, 16, 8, 1, True),    # projection shortcut + preact output
        (2, 4, 16, 16, 8, 2, False),   # stride-2 downsampling block
        (2, 8, 16, 16, 8, 1, False),   # identity shortcut
    ]
    keys = jax.random.split(key, len(configs))
    # bf16 MXU inputs vs. f32 reference -> relaxed tolerance.
    ATOL = RTOL = 5e-2
    for idx, (N, Cin, H, W, P, stride, is_last) in enumerate(configs):
        k_p, k_x = jax.random.split(keys[idx])
        has_sc = (stride != 1) or (Cin != P)
        prm = make_params(k_p, Cin, P, has_sc)
        x = jax.random.normal(k_x, (N, Cin, H, W), jnp.float32)

        got = basic_block_forward(x, prm, stride=stride, is_last=is_last)
        got = jax.block_until_ready(got)
        ref = _ref_forward(x, prm, stride, is_last)

        if is_last:
            go, gp = got
            ro, rp = ref
            assert go.shape == ro.shape and gp.shape == rp.shape
            assert jnp.allclose(go, ro, atol=ATOL, rtol=RTOL), f"out mismatch cfg{idx}"
            assert jnp.allclose(gp, rp, atol=ATOL, rtol=RTOL), f"preact mismatch cfg{idx}"
        else:
            assert got.shape == ref.shape
            assert jnp.allclose(got, ref, atol=ATOL, rtol=RTOL), f"out mismatch cfg{idx}"

    print("KERNEL_OK")
</pallas_src>

<mosaic_0001>
module attributes {stable_mosaic.version = 11 : i64} {
  func.func @kernel(%arg0: i32, %arg1: memref<1x256x36xbf16, #tpu.memory_space<vmem>>, %arg2: memref<36x8xbf16, #tpu.memory_space<vmem>>, %arg3: memref<1x8xf32, #tpu.memory_space<vmem>>, %arg4: memref<3x24x8xbf16, #tpu.memory_space<vmem>>, %arg5: memref<1x8xf32, #tpu.memory_space<vmem>>, %arg6: memref<1x256x4xbf16, #tpu.memory_space<vmem>>, %arg7: memref<4x8xbf16, #tpu.memory_space<vmem>>, %arg8: memref<1x8xf32, #tpu.memory_space<vmem>>, %arg9: memref<1x256x8xf32, #tpu.memory_space<vmem>>, %arg10: memref<1x256x8xf32, #tpu.memory_space<vmem>>) attributes {dimension_semantics = [#tpu.dimension_semantics<parallel>], iteration_bounds = array<i64: 2>, scalar_prefetch = 0 : i64, scratch_operands = 0 : i64, tpu.core_type = #tpu.core_type<tc>, window_params = [{transform_indices = @transform_0, window_bounds = array<i64: 1, 256, 36>}, {pipeline_mode = #tpu.pipeline_mode<synchronous>, transform_indices = @transform_1, window_bounds = array<i64: 36, 8>}, {pipeline_mode = #tpu.pipeline_mode<synchronous>, transform_indices = @transform_2, window_bounds = array<i64: 1, 8>}, {pipeline_mode = #tpu.pipeline_mode<synchronous>, transform_indices = @transform_3, window_bounds = array<i64: 3, 24, 8>}, {pipeline_mode = #tpu.pipeline_mode<synchronous>, transform_indices = @transform_4, window_bounds = array<i64: 1, 8>}, {transform_indices = @transform_5, window_bounds = array<i64: 1, 256, 4>}, {pipeline_mode = #tpu.pipeline_mode<synchronous>, transform_indices = @transform_6, window_bounds = array<i64: 4, 8>}, {pipeline_mode = #tpu.pipeline_mode<synchronous>, transform_indices = @transform_7, window_bounds = array<i64: 1, 8>}, {transform_indices = @transform_8, window_bounds = array<i64: 1, 256, 8>}, {transform_indices = @transform_9, window_bounds = array<i64: 1, 256, 8>}]} {
    %c0 = arith.constant 0 : index
    %c0_0 = arith.constant 0 : index
    %c0_1 = arith.constant 0 : index
    %0 = vector.load %arg1[%c0, %c0_0, %c0_1] : memref<1x256x36xbf16, #tpu.memory_space<vmem>>, vector<1x256x36xbf16>
    %1 = vector.shape_cast %0 : vector<1x256x36xbf16> to vector<256x36xbf16>
    %c0_2 = arith.constant 0 : index
    %c0_3 = arith.constant 0 : index
    %2 = vector.load %arg2[%c0_2, %c0_3] : memref<36x8xbf16, #tpu.memory_space<vmem>>, vector<36x8xbf16>
    %cst = arith.constant dense<0.000000e+00> : vector<256x8xf32>
    %3 = tpu.matmul %1, %2, %cst {dimension_numbers = #tpu.dot_dimension_numbers<[1], [0], [0], [1], [0, 0, 1, 1], [], []>} : vector<256x36xbf16>, vector<36x8xbf16>, vector<256x8xf32> -> vector<256x8xf32>
    %c0_4 = arith.constant 0 : index
    %c0_5 = arith.constant 0 : index
    %4 = vector.load %arg3[%c0_4, %c0_5] : memref<1x8xf32, #tpu.memory_space<vmem>>, vector<1x8xf32>
    %5 = vector.broadcast %4 : vector<1x8xf32> to vector<256x8xf32>
    %6 = arith.addf %3, %5 : vector<256x8xf32>
    %cst_6 = arith.constant 0.000000e+00 : f32
    %7 = vector.broadcast %cst_6 : f32 to vector<256x8xf32>
    %8 = arith.maximumf %6, %7 : vector<256x8xf32>
    %9 = vector.shape_cast %8 : vector<256x8xf32> to vector<16x16x8xf32>
    %cst_7 = arith.constant 0.000000e+00 : f32
    %10 = vector.broadcast %cst_7 : f32 to vector<16x1x8xf32>
    %11 = tpu.concatenate %10, %9, %10 in 1 : vector<16x1x8xf32>, vector<16x16x8xf32>, vector<16x1x8xf32> -> vector<16x18x8xf32>
    %cst_8 = arith.constant 0.000000e+00 : f32
    %12 = vector.broadcast %cst_8 : f32 to vector<1x18x8xf32>
    %13 = tpu.concatenate %12, %11, %12 in 0 : vector<1x18x8xf32>, vector<16x18x8xf32>, vector<1x18x8xf32> -> vector<18x18x8xf32>
    %14 = vector.extract_strided_slice %13 {offsets = [0, 0, 0], sizes = [16, 18, 8], strides = [1, 1, 1]} : vector<18x18x8xf32> to vector<16x18x8xf32>
    %15 = vector.extract_strided_slice %14 {offsets = [0, 0, 0], sizes = [16, 16, 8], strides = [1, 1, 1]} : vector<16x18x8xf32> to vector<16x16x8xf32>
    %16 = vector.extract_strided_slice %14 {offsets = [0, 1, 0], sizes = [16, 16, 8], strides = [1, 1, 1]} : vector<16x18x8xf32> to vector<16x16x8xf32>
    %17 = vector.extract_strided_slice %14 {offsets = [0, 2, 0], sizes = [16, 16, 8], strides = [1, 1, 1]} : vector<16x18x8xf32> to vector<16x16x8xf32>
    %18 = tpu.concatenate %15, %16, %17 in 2 : vector<16x16x8xf32>, vector<16x16x8xf32>, vector<16x16x8xf32> -> vector<16x16x24xf32>
    %19 = vector.shape_cast %18 : vector<16x16x24xf32> to vector<256x24xf32>
    %20 = arith.truncf %19 : vector<256x24xf32> to vector<256x24xbf16>
    %c0_9 = arith.constant 0 : index
    %c0_10 = arith.constant 0 : index
    %c0_11 = arith.constant 0 : index
    %21 = vector.load %arg4[%c0_9, %c0_10, %c0_11] : memref<3x24x8xbf16, #tpu.memory_space<vmem>>, vector<1x24x8xbf16>
    %22 = vector.shape_cast %21 : vector<1x24x8xbf16> to vector<24x8xbf16>
    %cst_12 = arith.constant dense<0.000000e+00> : vector<256x8xf32>
    %23 = tpu.matmul %20, %22, %cst_12 {dimension_numbers = #tpu.dot_dimension_numbers<[1], [0], [0], [1], [0, 0, 1, 1], [], []>} : vector<256x24xbf16>, vector<24x8xbf16>, vector<256x8xf32> -> vector<256x8xf32>
    %24 = vector.extract_strided_slice %13 {offsets = [1, 0, 0], sizes = [16, 18, 8], strides = [1, 1, 1]} : vector<18x18x8xf32> to vector<16x18x8xf32>
    %25 = vector.extract_strided_slice %24 {offsets = [0, 0, 0], sizes = [16, 16, 8], strides = [1, 1, 1]} : vector<16x18x8xf32> to vector<16x16x8xf32>
    %26 = vector.extract_strided_slice %24 {offsets = [0, 1, 0], sizes = [16, 16, 8], strides = [1, 1, 1]} : vector<16x18x8xf32> to vector<16x16x8xf32>
    %27 = vector.extract_strided_slice %24 {offsets = [0, 2, 0], sizes = [16, 16, 8], strides = [1, 1, 1]} : vector<16x18x8xf32> to vector<16x16x8xf32>
    %28 = tpu.concatenate %25, %26, %27 in 2 : vector<16x16x8xf32>, vector<16x16x8xf32>, vector<16x16x8xf32> -> vector<16x16x24xf32>
    %29 = vector.shape_cast %28 : vector<16x16x24xf32> to vector<256x24xf32>
    %30 = arith.truncf %29 : vector<256x24xf32> to vector<256x24xbf16>
    %c1 = arith.constant 1 : index
    %c0_13 = arith.constant 0 : index
    %c0_14 = arith.constant 0 : index
    %31 = vector.load %arg4[%c1, %c0_13, %c0_14] : memref<3x24x8xbf16, #tpu.memory_space<vmem>>, vector<1x24x8xbf16>
    %32 = vector.shape_cast %31 : vector<1x24x8xbf16> to vector<24x8xbf16>
    %cst_15 = arith.constant dense<0.000000e+00> : vector<256x8xf32>
    %33 = tpu.matmul %30, %32, %cst_15 {dimension_numbers = #tpu.dot_dimension_numbers<[1], [0], [0], [1], [0, 0, 1, 1], [], []>} : vector<256x24xbf16>, vector<24x8xbf16>, vector<256x8xf32> -> vector<256x8xf32>
    %34 = arith.addf %23, %33 : vector<256x8xf32>
    %35 = vector.extract_strided_slice %13 {offsets = [2, 0, 0], sizes = [16, 18, 8], strides = [1, 1, 1]} : vector<18x18x8xf32> to vector<16x18x8xf32>
    %36 = vector.extract_strided_slice %35 {offsets = [0, 0, 0], sizes = [16, 16, 8], strides = [1, 1, 1]} : vector<16x18x8xf32> to vector<16x16x8xf32>
    %37 = vector.extract_strided_slice %35 {offsets = [0, 1, 0], sizes = [16, 16, 8], strides = [1, 1, 1]} : vector<16x18x8xf32> to vector<16x16x8xf32>
    %38 = vector.extract_strided_slice %35 {offsets = [0, 2, 0], sizes = [16, 16, 8], strides = [1, 1, 1]} : vector<16x18x8xf32> to vector<16x16x8xf32>
    %39 = tpu.concatenate %36, %37, %38 in 2 : vector<16x16x8xf32>, vector<16x16x8xf32>, vector<16x16x8xf32> -> vector<16x16x24xf32>
    %40 = vector.shape_cast %39 : vector<16x16x24xf32> to vector<256x24xf32>
    %41 = arith.truncf %40 : vector<256x24xf32> to vector<256x24xbf16>
    %c2 = arith.constant 2 : index
    %c0_16 = arith.constant 0 : index
    %c0_17 = arith.constant 0 : index
    %42 = vector.load %arg4[%c2, %c0_16, %c0_17] : memref<3x24x8xbf16, #tpu.memory_space<vmem>>, vector<1x24x8xbf16>
    %43 = vector.shape_cast %42 : vector<1x24x8xbf16> to vector<24x8xbf16>
    %cst_18 = arith.constant dense<0.000000e+00> : vector<256x8xf32>
    %44 = tpu.matmul %41, %43, %cst_18 {dimension_numbers = #tpu.dot_dimension_numbers<[1], [0], [0], [1], [0, 0, 1, 1], [], []>} : vector<256x24xbf16>, vector<24x8xbf16>, vector<256x8xf32> -> vector<256x8xf32>
    %45 = arith.addf %34, %44 : vector<256x8xf32>
    %c0_19 = arith.constant 0 : index
    %c0_20 = arith.constant 0 : index
    %46 = vector.load %arg5[%c0_19, %c0_20] : memref<1x8xf32, #tpu.memory_space<vmem>>, vector<1x8xf32>
    %47 = vector.broadcast %46 : vector<1x8xf32> to vector<256x8xf32>
    %48 = arith.addf %45, %47 : vector<256x8xf32>
    %c0_21 = arith.constant 0 : index
    %c0_22 = arith.constant 0 : index
    %c0_23 = arith.constant 0 : index
    %49 = vector.load %arg6[%c0_21, %c0_22, %c0_23] : memref<1x256x4xbf16, #tpu.memory_space<vmem>>, vector<1x256x4xbf16>
    %50 = vector.shape_cast %49 : vector<1x256x4xbf16> to vector<256x4xbf16>
    %c0_24 = arith.constant 0 : index
    %c0_25 = arith.constant 0 : index
    %51 = vector.load %arg7[%c0_24, %c0_25] : memref<4x8xbf16, #tpu.memory_space<vmem>>, vector<4x8xbf16>
    %cst_26 = arith.constant dense<0.000000e+00> : vector<256x8xf32>
    %52 = tpu.matmul %50, %51, %cst_26 {dimension_numbers = #tpu.dot_dimension_numbers<[1], [0], [0], [1], [0, 0, 1, 1], [], []>} : vector<256x4xbf16>, vector<4x8xbf16>, vector<256x8xf32> -> vector<256x8xf32>
    %c0_27 = arith.constant 0 : index
    %c0_28 = arith.constant 0 : index
    %53 = vector.load %arg8[%c0_27, %c0_28] : memref<1x8xf32, #tpu.memory_space<vmem>>, vector<1x8xf32>
    %54 = vector.broadcast %53 : vector<1x8xf32> to vector<256x8xf32>
    %55 = arith.addf %52, %54 : vector<256x8xf32>
    %56 = arith.addf %48, %55 : vector<256x8xf32>
    %cst_29 = arith.constant 0.000000e+00 : f32
    %57 = vector.broadcast %cst_29 : f32 to vector<256x8xf32>
    %58 = arith.maximumf %56, %57 : vector<256x8xf32>
    %c0_30 = arith.constant 0 : index
    %c0_31 = arith.constant 0 : index
    %c0_32 = arith.constant 0 : index
    %59 = vector.load %arg9[%c0_30, %c0_31, %c0_32] : memref<1x256x8xf32, #tpu.memory_space<vmem>>, vector<1x256x8xf32>
    %60 = vector.shape_cast %59 : vector<1x256x8xf32> to vector<256x8xf32>
    %61 = vector.shape_cast %58 : vector<256x8xf32> to vector<1x256x8xf32>
    tpu.vector_store %arg9[%c0_30, %c0_31, %c0_32], %61 {strides = array<i32>} : memref<1x256x8xf32, #tpu.memory_space<vmem>>, vector<1x256x8xf32>,
    %c0_33 = arith.constant 0 : index
    %c0_34 = arith.constant 0 : index
    %c0_35 = arith.constant 0 : index
    %62 = vector.load %arg10[%c0_33, %c0_34, %c0_35] : memref<1x256x8xf32, #tpu.memory_space<vmem>>, vector<1x256x8xf32>
    %63 = vector.shape_cast %62 : vector<1x256x8xf32> to vector<256x8xf32>
    %64 = vector.shape_cast %56 : vector<256x8xf32> to vector<1x256x8xf32>
    tpu.vector_store %arg10[%c0_33, %c0_34, %c0_35], %64 {strides = array<i32>} : memref<1x256x8xf32, #tpu.memory_space<vmem>>, vector<1x256x8xf32>,
    return
  }
  func.func @transform_0(%arg0: i32) -> (i32, i32, i32) {
    %c0_i32 = arith.constant 0 : i32
    %c0_i32_0 = arith.constant 0 : i32
    %c0_i32_1 = arith.constant 0 : i32
    return %arg0, %c0_i32, %c0_i32_0 : i32, i32, i32
  }
  func.func @transform_1(%arg0: i32) -> (i32, i32) {
    %c0_i32 = arith.constant 0 : i32
    %c0_i32_0 = arith.constant 0 : i32
    %c0_i32_1 = arith.constant 0 : i32
    return %c0_i32, %c0_i32_0 : i32, i32
  }
  func.func @transform_2(%arg0: i32) -> (i32, i32) {
    %c0_i32 = arith.constant 0 : i32
    %c0_i32_0 = arith.constant 0 : i32
    %c0_i32_1 = arith.constant 0 : i32
    return %c0_i32, %c0_i32_0 : i32, i32
  }
  func.func @transform_3(%arg0: i32) -> (i32, i32, i32) {
    %c0_i32 = arith.constant 0 : i32
    %c0_i32_0 = arith.constant 0 : i32
    %c0_i32_1 = arith.constant 0 : i32
    %c0_i32_2 = arith.constant 0 : i32
    return %c0_i32, %c0_i32_0, %c0_i32_1 : i32, i32, i32
  }
  func.func @transform_4(%arg0: i32) -> (i32, i32) {
    %c0_i32 = arith.constant 0 : i32
    %c0_i32_0 = arith.constant 0 : i32
    %c0_i32_1 = arith.constant 0 : i32
    return %c0_i32, %c0_i32_0 : i32, i32
  }
  func.func @transform_5(%arg0: i32) -> (i32, i32, i32) {
    %c0_i32 = arith.constant 0 : i32
    %c0_i32_0 = arith.constant 0 : i32
    %c0_i32_1 = arith.constant 0 : i32
    return %arg0, %c0_i32, %c0_i32_0 : i32, i32, i32
  }
  func.func @transform_6(%arg0: i32) -> (i32, i32) {
    %c0_i32 = arith.constant 0 : i32
    %c0_i32_0 = arith.constant 0 : i32
    %c0_i32_1 = arith.constant 0 : i32
    return %c0_i32, %c0_i32_0 : i32, i32
  }
  func.func @transform_7(%arg0: i32) -> (i32, i32) {
    %c0_i32 = arith.constant 0 : i32
    %c0_i32_0 = arith.constant 0 : i32
    %c0_i32_1 = arith.constant 0 : i32
    return %c0_i32, %c0_i32_0 : i32, i32
  }
  func.func @transform_8(%arg0: i32) -> (i32, i32, i32) {
    %c0_i32 = arith.constant 0 : i32
    %c0_i32_0 = arith.constant 0 : i32
    %c0_i32_1 = arith.constant 0 : i32
    return %arg0, %c0_i32, %c0_i32_0 : i32, i32, i32
  }
  func.func @transform_9(%arg0: i32) -> (i32, i32, i32) {
    %c0_i32 = arith.constant 0 : i32
    %c0_i32_0 = arith.constant 0 : i32
    %c0_i32_1 = arith.constant 0 : i32
    return %arg0, %c0_i32, %c0_i32_0 : i32, i32, i32
  }
}

</mosaic_0001>

<llo_original>
// kernel: tpu_custom_call.1
$region0: #{tpu_custom_call.1}
  #allocation0 [shape = 'u32[]', space=smem, size = 0x4, offset = 0x4, fixed_abs, tag = 'smem constant byte address 0x4 - core index']
  #allocation1 [shape = 'u32[144,128]{1,0:T(1,128)}', space=vmem, size = 0x12000, scoped, tag = 'internal scratch']
  %s0 = inlined_call_operand.vmem [shape: bf16[2,256,36], index: 0, kind: input, shape index: {}]
  %s1 = inlined_call_operand.vmem [shape: bf16[36,8], index: 1, kind: input, shape index: {}]
  %s2 = inlined_call_operand.vmem [shape: f32[1,8], index: 2, kind: input, shape index: {}]
  %s3 = inlined_call_operand.vmem [shape: bf16[3,24,8], index: 3, kind: input, shape index: {}]
  %s4 = inlined_call_operand.vmem [shape: f32[1,8], index: 4, kind: input, shape index: {}]
  %s5 = inlined_call_operand.vmem [shape: bf16[2,256,4], index: 5, kind: input, shape index: {}]
  %s6 = inlined_call_operand.vmem [shape: bf16[4,8], index: 6, kind: input, shape index: {}]
  %s7 = inlined_call_operand.vmem [shape: f32[1,8], index: 7, kind: input, shape index: {}]
  %s8 = inlined_call_operand.vmem [shape: f32[2,256,8], index: 8, kind: output, shape index: {0}]
  %s9 = inlined_call_operand.vmem [shape: f32[2,256,8], index: 9, kind: output, shape index: {1}]
  %10 = xla_tuple %s8, %s9
  %s11 = sld [smem:[#allocation0]]
  $region73: #{tpu_custom_call.1} parent=0
    _
  %s13 = ssub.s32 1, %s11
  %s14 = scalar_select 0, %s13, %s11
  loop: start=0, step=1, limit=4
  $region2: #{tpu_custom_call.1} parent=0 // loop_pre_header
    _
  $region3: #{tpu_custom_call.1} parent=0 // loop_header
    %s16 = sphi 0, %s20
    %p17 = scmp.ge.s32.totalorder %s16, 4
    %s26 = sphi 0, %s28
    %s29 = sphi 0, %s26
    %s30 = sphi 0, %s29
    %s46 = sphi 0, %s30
    %s50 = sphi 0, %s50
    %s52 = sphi 0, %s50
    %s53 = sphi 0, %s52
    %s67 = sphi 0, %s53
    %s71 = sphi 0, %s71
    %s73 = sphi 0, %s71
    %s74 = sphi 0, %s73
    %s88 = sphi 0, %s74
    %s92 = sphi 0, %s92
    %s94 = sphi 0, %s92
    %s95 = sphi 0, %s94
    %s109 = sphi 0, %s95
    %s113 = sphi 0, %s113
    %s115 = sphi 0, %s113
    %s116 = sphi 0, %s115
    %s130 = sphi 0, %s116
    %s136 = sphi 0, %s138
    %s139 = sphi 0, %s136
    %s140 = sphi 0, %s139
    %s156 = sphi 0, %s140
    %s160 = sphi 0, %s160
    %s162 = sphi 0, %s160
    %s163 = sphi 0, %s162
    %s177 = sphi 0, %s163
    %s181 = sphi 0, %s181
    %s183 = sphi 0, %s181
    %s184 = sphi 0, %s183
    %s198 = sphi 0, %s184
    %s204 = sphi 0, %s206
    %s207 = sphi 0, %s204
    %s208 = sphi 0, %s207
    %s224 = sphi 0, %s208
    %s230 = sphi 0, %s232
    %s233 = sphi 0, %s230
    %s234 = sphi 0, %s233
    %s250 = sphi 0, %s234
  $region4: #{tpu_custom_call.1} parent=0 // loop_header_branch
    %19 = sbr.rel (%p17) target = $region8
  $region5: #{tpu_custom_call.1} parent=0 // loop_body
    %s21 = ssub.s32 %s16, 1
    %s22 = ssub.s32 %s16, 2
    %s23 = sadd.s32 %s16, 1
    %s24 = ssub.s32 %s16, %s23
    %p25 = scmp.eq.s32.totalorder %s24, 0
    %s27 = sadd.s32 %s26, 1
    %s28 = scalar_select %p25, %s26, %s27
    %p31 = pneg %p25
    %p32 = scmp.eq.s32.totalorder %s16, 1
    %p33 = por %p31, %p32
    %p34 = scmp.ne.s32.totalorder %s26, %s29
    %p35 = scmp.eq.s32.totalorder %s16, 0
    %p36 = por %p34, %p35
    %p37 = scmp.ne.s32.totalorder %s26, %s29
    %p38 = scmp.eq.s32.totalorder %s21, 1
    %p39 = por %p37, %p38
    %p40 = scmp.ne.s32.totalorder %s29, %s30
    %p41 = scmp.eq.s32.totalorder %s21, 0
    %p42 = por %p40, %p41
    %p43 = scmp.ne.s32.totalorder %s29, %s30
    %p44 = scmp.eq.s32.totalorder %s22, 1
    %p45 = por %p43, %p44
    %p47 = scmp.ne.s32.totalorder %s30, %s46
    %p48 = scmp.eq.s32.totalorder %s22, 0
    %p49 = por %p47, %p48
    %s51 = sadd.s32 %s50, 1
    %p54 = scmp.eq.s32.totalorder %s16, 1
    %p55 = scmp.ne.s32.totalorder %s50, %s52
    %p56 = scmp.eq.s32.totalorder %s16, 0
    %p57 = por %p55, %p56
    %p58 = scmp.ne.s32.totalorder %s50, %s52
    %p59 = scmp.eq.s32.totalorder %s21, 1
    %p60 = por %p58, %p59
    %p61 = scmp.ne.s32.totalorder %s52, %s53
    %p62 = scmp.eq.s32.totalorder %s21, 0
    %p63 = por %p61, %p62
    %p64 = scmp.ne.s32.totalorder %s52, %s53
    %p65 = scmp.eq.s32.totalorder %s22, 1
    %p66 = por %p64, %p65
    %p68 = scmp.ne.s32.totalorder %s53, %s67
    %p69 = scmp.eq.s32.totalorder %s22, 0
    %p70 = por %p68, %p69
    %s72 = sadd.s32 %s71, 1
    %p75 = scmp.eq.s32.totalorder %s16, 1
    %p76 = scmp.ne.s32.totalorder %s71, %s73
    %p77 = scmp.eq.s32.totalorder %s16, 0
    %p78 = por %p76, %p77
    %p79 = scmp.ne.s32.totalorder %s71, %s73
    %p80 = scmp.eq.s32.totalorder %s21, 1
    %p81 = por %p79, %p80
    %p82 = scmp.ne.s32.totalorder %s73, %s74
    %p83 = scmp.eq.s32.totalorder %s21, 0
    %p84 = por %p82, %p83
    %p85 = scmp.ne.s32.totalorder %s73, %s74
    %p86 = scmp.eq.s32.totalorder %s22, 1
    %p87 = por %p85, %p86
    %p89 = scmp.ne.s32.totalorder %s74, %s88
    %p90 = scmp.eq.s32.totalorder %s22, 0
    %p91 = por %p89, %p90
    %s93 = sadd.s32 %s92, 1
    %p96 = scmp.eq.s32.totalorder %s16, 1
    %p97 = scmp.ne.s32.totalorder %s92, %s94
    %p98 = scmp.eq.s32.totalorder %s16, 0
    %p99 = por %p97, %p98
    %p100 = scmp.ne.s32.totalorder %s92, %s94
    %p101 = scmp.eq.s32.totalorder %s21, 1
    %p102 = por %p100, %p101
    %p103 = scmp.ne.s32.totalorder %s94, %s95
    %p104 = scmp.eq.s32.totalorder %s21, 0
    %p105 = por %p103, %p104
    %p106 = scmp.ne.s32.totalorder %s94, %s95
    %p107 = scmp.eq.s32.totalorder %s22, 1
    %p108 = por %p106, %p107
    %p110 = scmp.ne.s32.totalorder %s95, %s109
    %p111 = scmp.eq.s32.totalorder %s22, 0
    %p112 = por %p110, %p111
    %s114 = sadd.s32 %s113, 1
    %p117 = scmp.eq.s32.totalorder %s16, 1
    %p118 = scmp.ne.s32.totalorder %s113, %s115
    %p119 = scmp.eq.s32.totalorder %s16, 0
    %p120 = por %p118, %p119
    %p121 = scmp.ne.s32.totalorder %s113, %s115
    %p122 = scmp.eq.s32.totalorder %s21, 1
    %p123 = por %p121, %p122
    %p124 = scmp.ne.s32.totalorder %s115, %s116
    %p125 = scmp.eq.s32.totalorder %s21, 0
    %p126 = por %p124, %p125
    %p127 = scmp.ne.s32.totalorder %s115, %s116
    %p128 = scmp.eq.s32.totalorder %s22, 1
    %p129 = por %p127, %p128
    %p131 = scmp.ne.s32.totalorder %s116, %s130
    %p132 = scmp.eq.s32.totalorder %s22, 0
    %p133 = por %p131, %p132
    %s134 = ssub.s32 %s16, %s23
    %p135 = scmp.eq.s32.totalorder %s134, 0
    %s137 = sadd.s32 %s136, 1
    %s138 = scalar_select %p135, %s136, %s137
    %p141 = pneg %p135
    %p142 = scmp.eq.s32.totalorder %s16, 1
    %p143 = por %p141, %p142
    %p144 = scmp.ne.s32.totalorder %s136, %s139
    %p145 = scmp.eq.s32.totalorder %s16, 0
    %p146 = por %p144, %p145
    %p147 = scmp.ne.s32.totalorder %s136, %s139
    %p148 = scmp.eq.s32.totalorder %s21, 1
    %p149 = por %p147, %p148
    %p150 = scmp.ne.s32.totalorder %s139, %s140
    %p151 = scmp.eq.s32.totalorder %s21, 0
    %p152 = por %p150, %p151
    %p153 = scmp.ne.s32.totalorder %s139, %s140
    %p154 = scmp.eq.s32.totalorder %s22, 1
    %p155 = por %p153, %p154
    %p157 = scmp.ne.s32.totalorder %s140, %s156
    %p158 = scmp.eq.s32.totalorder %s22, 0
    %p159 = por %p157, %p158
    %s161 = sadd.s32 %s160, 1
    %p164 = scmp.eq.s32.totalorder %s16, 1
    %p165 = scmp.ne.s32.totalorder %s160, %s162
    %p166 = scmp.eq.s32.totalorder %s16, 0
    %p167 = por %p165, %p166
    %p168 = scmp.ne.s32.totalorder %s160, %s162
    %p169 = scmp.eq.s32.totalorder %s21, 1
    %p170 = por %p168, %p169
    %p171 = scmp.ne.s32.totalorder %s162, %s163
    %p172 = scmp.eq.s32.totalorder %s21, 0
    %p173 = por %p171, %p172
    %p174 = scmp.ne.s32.totalorder %s162, %s163
    %p175 = scmp.eq.s32.totalorder %s22, 1
    %p176 = por %p174, %p175
    %p178 = scmp.ne.s32.totalorder %s163, %s177
    %p179 = scmp.eq.s32.totalorder %s22, 0
    %p180 = por %p178, %p179
    %s182 = sadd.s32 %s181, 1
    %p185 = scmp.eq.s32.totalorder %s16, 1
    %p186 = scmp.ne.s32.totalorder %s181, %s183
    %p187 = scmp.eq.s32.totalorder %s16, 0
    %p188 = por %p186, %p187
    %p189 = scmp.ne.s32.totalorder %s181, %s183
    %p190 = scmp.eq.s32.totalorder %s21, 1
    %p191 = por %p189, %p190
    %p192 = scmp.ne.s32.totalorder %s183, %s184
    %p193 = scmp.eq.s32.totalorder %s21, 0
    %p194 = por %p192, %p193
    %p195 = scmp.ne.s32.totalorder %s183, %s184
    %p196 = scmp.eq.s32.totalorder %s22, 1
    %p197 = por %p195, %p196
    %p199 = scmp.ne.s32.totalorder %s184, %s198
    %p200 = scmp.eq.s32.totalorder %s22, 0
    %p201 = por %p199, %p200
    %s202 = ssub.s32 %s16, %s23
    %p203 = scmp.eq.s32.totalorder %s202, 0
    %s205 = sadd.s32 %s204, 1
    %s206 = scalar_select %p203, %s204, %s205
    %p209 = pneg %p203
    %p210 = scmp.eq.s32.totalorder %s16, 1
    %p211 = por %p209, %p210
    %p212 = scmp.ne.s32.totalorder %s204, %s207
    %p213 = scmp.eq.s32.totalorder %s16, 0
    %p214 = por %p212, %p213
    %p215 = scmp.ne.s32.totalorder %s204, %s207
    %p216 = scmp.eq.s32.totalorder %s21, 1
    %p217 = por %p215, %p216
    %p218 = scmp.ne.s32.totalorder %s207, %s208
    %p219 = scmp.eq.s32.totalorder %s21, 0
    %p220 = por %p218, %p219
    %p221 = scmp.ne.s32.totalorder %s207, %s208
    %p222 = scmp.eq.s32.totalorder %s22, 1
    %p223 = por %p221, %p222
    %p225 = scmp.ne.s32.totalorder %s208, %s224
    %p226 = scmp.eq.s32.totalorder %s22, 0
    %p227 = por %p225, %p226
    %s228 = ssub.s32 %s16, %s23
    %p229 = scmp.eq.s32.totalorder %s228, 0
    %s231 = sadd.s32 %s230, 1
    %s232 = scalar_select %p229, %s230, %s231
    %p235 = pneg %p229
    %p236 = scmp.eq.s32.totalorder %s16, 1
    %p237 = por %p235, %p236
    %p238 = scmp.ne.s32.totalorder %s230, %s233
    %p239 = scmp.eq.s32.totalorder %s16, 0
    %p240 = por %p238, %p239
    %p241 = scmp.ne.s32.totalorder %s230, %s233
    %p242 = scmp.eq.s32.totalorder %s21, 1
    %p243 = por %p241, %p242
    %p244 = scmp.ne.s32.totalorder %s233, %s234
    %p245 = scmp.eq.s32.totalorder %s21, 0
    %p246 = por %p244, %p245
    %p247 = scmp.ne.s32.totalorder %s233, %s234
    %p248 = scmp.eq.s32.totalorder %s22, 1
    %p249 = por %p247, %p248
    %p251 = scmp.ne.s32.totalorder %s234, %s250
    %p252 = scmp.eq.s32.totalorder %s22, 0
    %p253 = por %p251, %p252
    %p254 = scmp.le.s32.totalorder 1, %s16
    %p255 = scmp.lt.s32.totalorder %s16, 3
    %p256 = pnand %p254, %p255
    %p257 = pneg %p256
    // Predicated region
    $region9: #{tpu_custom_call.1} parent=5 // pred_check
      _
    $region10: #{tpu_custom_call.1} parent=5 // pred_check_branch
      %259 = sbr.rel (%p256) target = $region12
    $region11: #{tpu_custom_call.1} parent=5 // pred_region
      %s260 = ssub.s32 %s16, 1
      // Predicated region
      $region13: #{tpu_custom_call.1} parent=11 // pred_check
        %p261 = pneg %p63
      $region14: #{tpu_custom_call.1} parent=11 // pred_check_branch
        %263 = sbr.rel (%p261) target = $region16
      $region15: #{tpu_custom_call.1} parent=11 // pred_region
        _
      $region16: #{tpu_custom_call.1} parent=11 // pred_fallthru
        _
      // Predicated region
      $region17: #{tpu_custom_call.1} parent=11 // pred_check
        %p264 = pneg %p84
      $region18: #{tpu_custom_call.1} parent=11 // pred_check_branch
        %266 = sbr.rel (%p264) target = $region20
      $region19: #{tpu_custom_call.1} parent=11 // pred_region
        _
      $region20: #{tpu_custom_call.1} parent=11 // pred_fallthru
        _
      // Predicated region
      $region21: #{tpu_custom_call.1} parent=11 // pred_check
        %p267 = pneg %p105
      $region22: #{tpu_custom_call.1} parent=11 // pred_check_branch
        %269 = sbr.rel (%p267) target = $region24
      $region23: #{tpu_custom_call.1} parent=11 // pred_region
        _
      $region24: #{tpu_custom_call.1} parent=11 // pred_fallthru
        _
      // Predicated region
      $region25: #{tpu_custom_call.1} parent=11 // pred_check
        %p270 = pneg %p126
      $region26: #{tpu_custom_call.1} parent=11 // pred_check_branch
        %272 = sbr.rel (%p270) target = $region28
      $region27: #{tpu_custom_call.1} parent=11 // pred_region
        _
      $region28: #{tpu_custom_call.1} parent=11 // pred_fallthru
        _
      // Predicated region
      $region29: #{tpu_custom_call.1} parent=11 // pred_check
        %p273 = pneg %p173
      $region30: #{tpu_custom_call.1} parent=11 // pred_check_branch
        %275 = sbr.rel (%p273) target = $region32
      $region31: #{tpu_custom_call.1} parent=11 // pred_region
        _
      $region32: #{tpu_custom_call.1} parent=11 // pred_fallthru
        _
      // Predicated region
      $region33: #{tpu_custom_call.1} parent=11 // pred_check
        %p276 = pneg %p194
      $region34: #{tpu_custom_call.1} parent=11 // pred_check_branch
        %278 = sbr.rel (%p276) target = $region36
      $region35: #{tpu_custom_call.1} parent=11 // pred_region
        _
      $region36: #{tpu_custom_call.1} parent=11 // pred_fallthru
        _
    $region12: #{tpu_custom_call.1} parent=5 // pred_fallthru
      _
    %p279 = scmp.lt.s32.totalorder %s16, 2
    // Predicated region
    $region37: #{tpu_custom_call.1} parent=5 // pred_check
      %p280 = pneg %p279
    $region38: #{tpu_custom_call.1} parent=5 // pred_check_branch
      %282 = sbr.rel (%p280) target = $region40
    $region39: #{tpu_custom_call.1} parent=5 // pred_region
      // Predicated region
      $region41: #{tpu_custom_call.1} parent=39 // pred_check
        %p283 = pneg %p36
      $region42: #{tpu_custom_call.1} parent=39 // pred_check_branch
        %285 = sbr.rel (%p283) target = $region44
      $region43: #{tpu_custom_call.1} parent=39 // pred_region
        %p286 = scmp.lt.s32.totalorder %s16, 1
        %s287 = scalar_select %p286, %s16, 1
        %s288 = smul.addr %s287, 32
        %s289 = smul.addr %s288, 4
        %s290 = scalar_lea.vmem %s0, %s289
      $region44: #{tpu_custom_call.1} parent=39 // pred_fallthru
        _
      // Predicated region
      $region45: #{tpu_custom_call.1} parent=39 // pred_check
        %p291 = pneg %p146
      $region46: #{tpu_custom_call.1} parent=39 // pred_check_branch
        %293 = sbr.rel (%p291) target = $region48
      $region47: #{tpu_custom_call.1} parent=39 // pred_region
        %p294 = scmp.lt.s32.totalorder %s16, 1
        %s295 = scalar_select %p294, %s16, 1
        %s296 = smul.addr %s295, 32
        %s297 = smul.addr %s296, 4
        %s298 = scalar_lea.vmem %s5, %s297
      $region48: #{tpu_custom_call.1} parent=39 // pred_fallthru
        _
    $region40: #{tpu_custom_call.1} parent=5 // pred_fallthru
      _
    %p299 = scmp.le.s32.totalorder 1, %s16
    %p300 = scmp.lt.s32.totalorder %s16, 3
    %p301 = pnand %p299, %p300
    %p302 = pneg %p301
    // Predicated region
    $region49: #{tpu_custom_call.1} parent=5 // pred_check
      _
    $region50: #{tpu_custom_call.1} parent=5 // pred_check_branch
      %304 = sbr.rel (%p301) target = $region52
    $region51: #{tpu_custom_call.1} parent=5 // pred_region
      %s305 = ssub.s32 %s16, 1
      %p306 = scmp.lt.s32.totalorder %s21, 1
      %s307 = scalar_select %p306, %s21, 1
      %s308 = smul.addr %s307, 32
      %s309 = smul.addr %s308, 4
      %s310 = scalar_lea.vmem %s0, %s309
      %p311 = pneg %p42
      %p312 = pneg %p39
      %p313 = pneg %p63
      %p314 = pneg %p60
      %p315 = pneg %p84
      %p316 = pneg %p81
      %p317 = pneg %p105
      %p318 = pneg %p102
      %p319 = pneg %p126
      %p320 = pneg %p123
      %p321 = scmp.lt.s32.totalorder %s21, 1
      %s322 = scalar_select %p321, %s21, 1
      %s323 = smul.addr %s322, 32
      %s324 = smul.addr %s323, 4
      %s325 = scalar_lea.vmem %s5, %s324
      %p326 = pneg %p152
      %p327 = pneg %p149
      %p328 = pneg %p173
      %p329 = pneg %p170
      %p330 = pneg %p194
      %p331 = pneg %p191
      %p332 = pneg %p220
      %p333 = pneg %p217
      %p334 = scmp.lt.s32.totalorder %s21, 1
      %s335 = scalar_select %p334, %s21, 1
      %s336 = smul.addr %s335, 32
      %s337 = smul.addr %s336, 8
      %s338 = scalar_lea.vmem %s8, %s337
      %p339 = pneg %p246
      %p340 = pneg %p243
      %p341 = scmp.lt.s32.totalorder %s21, 1
      %s342 = scalar_select %p341, %s21, 1
      %s343 = smul.addr %s342, 32
      %s344 = smul.addr %s343, 8
      %s345 = scalar_lea.vmem %s9, %s344
      %p346 = scmp.lt.s32.totalorder %s21, 1
      %s347 = scalar_select %p346, %s21, 1
      %s348 = smul.addr %s347, 32
      %s349 = smul.addr %s348, 4
      %s350 = scalar_lea.vmem %s0, %s349
      %p351 = scmp.lt.s32.totalorder %s21, 1
      %s352 = scalar_select %p351, %s21, 1
      %s353 = smul.addr %s352, 32
      %s354 = smul.addr %s353, 4
      %s355 = scalar_lea.vmem %s5, %s354
      %p356 = scmp.lt.s32.totalorder %s21, 1
      %s357 = scalar_select %p356, %s21, 1
      %s358 = smul.addr %s357, 32
      %s359 = smul.addr %s358, 8
      %s360 = scalar_lea.vmem %s8, %s359
      %p361 = scmp.lt.s32.totalorder %s21, 1
      %s362 = scalar_select %p361, %s21, 1
      %s363 = smul.addr %s362, 32
      %s364 = smul.addr %s363, 8
      %s365 = scalar_lea.vmem %s9, %s364
      %v367 = vld [vmem:[%s350] sm:$0xf]
      %v368 = vld [vmem:[%s350 + $0x4] sm:$0xf]
      %v369 = vld [vmem:[%s350 + $0x8] sm:$0xf]
      %v370 = vld [vmem:[%s350 + $0xc] sm:$0xf]
      %v371 = vld [vmem:[%s350 + $0x10] sm:$0xf]
      %v372 = vld [vmem:[%s350 + $0x14] sm:$0xf]
      %v373 = vld [vmem:[%s350 + $0x18] sm:$0xf]
      %v374 = vld [vmem:[%s350 + $0x1c] sm:$0xf]
      %v375 = vld [vmem:[%s350 + $0x20] sm:$0xf]
      %v376 = vld [vmem:[%s350 + $0x24] sm:$0xf]
      %v377 = vld [vmem:[%s350 + $0x28] sm:$0xf]
      %v378 = vld [vmem:[%s350 + $0x2c] sm:$0xf]
      %v379 = vld [vmem:[%s350 + $0x30] sm:$0xf]
      %v380 = vld [vmem:[%s350 + $0x34] sm:$0xf]
      %v381 = vld [vmem:[%s350 + $0x38] sm:$0xf]
      %v382 = vld [vmem:[%s350 + $0x3c] sm:$0xf]
      %v383 = vld [vmem:[%s350 + $0x40] sm:$0xf]
      %v384 = vld [vmem:[%s350 + $0x44] sm:$0xf]
      %v385 = vld [vmem:[%s350 + $0x48] sm:$0xf]
      %v386 = vld [vmem:[%s350 + $0x4c] sm:$0xf]
      %v387 = vld [vmem:[%s350 + $0x50] sm:$0xf]
      %v388 = vld [vmem:[%s350 + $0x54] sm:$0xf]
      %v389 = vld [vmem:[%s350 + $0x58] sm:$0xf]
      %v390 = vld [vmem:[%s350 + $0x5c] sm:$0xf]
      %v391 = vld [vmem:[%s350 + $0x60] sm:$0xf]
      %v392 = vld [vmem:[%s350 + $0x64] sm:$0xf]
      %v393 = vld [vmem:[%s350 + $0x68] sm:$0xf]
      %v394 = vld [vmem:[%s350 + $0x6c] sm:$0xf]
      %v395 = vld [vmem:[%s350 + $0x70] sm:$0xf]
      %v396 = vld [vmem:[%s350 + $0x74] sm:$0xf]
      %v397 = vld [vmem:[%s350 + $0x78] sm:$0xf]
      %v398 = vld [vmem:[%s350 + $0x7c] sm:$0xf]
      %v399 = vld [vmem:[%s1] sm:$0xf]
      %v400 = vld [vmem:[%s1 + $0x4] sm:$0xf]
      %v401 = vld [vmem:[%s1 + $0x8] sm:$0xf]
      %v402 = vld [vmem:[%s1 + $0xc] sm:$0xf]
      %v403 = vld [vmem:[%s1 + $0x10] sm:$0x3]
      %v404 = vld [vmem:[%s2] sm:$0x1]
      %v406 = vlaneseq
      %v407 = vshrl.u32 %v406, 7
      %v408 = vsub.s32 0, %v407
      %v409 = vrot.slane %v404, %v408
      %v443 = vunpack.c.l.b16 %v367
      %v444 = vunpack.c.l.b16 %v368
      %v445 = vunpack.c.l.b16 %v369
      %v446 = vunpack.c.l.b16 %v370
      %v447 = vunpack.c.l.b16 %v371
      %v448 = vunpack.c.l.b16 %v372
      %v449 = vunpack.c.l.b16 %v373
      %v450 = vunpack.c.l.b16 %v374
      %v451 = vunpack.c.l.b16 %v375
      %v452 = vunpack.c.l.b16 %v376
      %v453 = vunpack.c.l.b16 %v377
      %v454 = vunpack.c.l.b16 %v378
      %v455 = vunpack.c.l.b16 %v379
      %v456 = vunpack.c.l.b16 %v380
      %v457 = vunpack.c.l.b16 %v381
      %v458 = vunpack.c.l.b16 %v382
      %v459 = vunpack.c.l.b16 %v383
      %v460 = vunpack.c.l.b16 %v384
      %v461 = vunpack.c.l.b16 %v385
      %v462 = vunpack.c.l.b16 %v386
      %v463 = vunpack.c.l.b16 %v387
      %v464 = vunpack.c.l.b16 %v388
      %v465 = vunpack.c.l.b16 %v389
      %v466 = vunpack.c.l.b16 %v390
      %v467 = vunpack.c.l.b16 %v391
      %v468 = vunpack.c.l.b16 %v392
      %v469 = vunpack.c.l.b16 %v393
      %v470 = vunpack.c.l.b16 %v394
      %v471 = vunpack.c.l.b16 %v395
      %v472 = vunpack.c.l.b16 %v396
      %v473 = vunpack.c.l.b16 %v397
      %v474 = vunpack.c.l.b16 %v398
      %v475 = vpack.c.b16 %v444, %v443
      %v476 = vpack.c.b16 %v446, %v445
      %v477 = vpack.c.b16 %v448, %v447
      %v478 = vpack.c.b16 %v450, %v449
      %v479 = vpack.c.b16 %v452, %v451
      %v480 = vpack.c.b16 %v454, %v453
      %v481 = vpack.c.b16 %v456, %v455
      %v482 = vpack.c.b16 %v458, %v457
      %v483 = vpack.c.b16 %v460, %v459
      %v484 = vpack.c.b16 %v462, %v461
      %v485 = vpack.c.b16 %v464, %v463
      %v486 = vpack.c.b16 %v466, %v465
      %v487 = vpack.c.b16 %v468, %v467
      %v488 = vpack.c.b16 %v470, %v469
      %v489 = vpack.c.b16 %v472, %v471
      %v490 = vpack.c.b16 %v474, %v473
      %v496 = vunpack.c.l.b16 %v399
      %v497 = vunpack.c.l.b16 %v400
      %v498 = vunpack.c.l.b16 %v401
      %v499 = vunpack.c.l.b16 %v402
      %v500 = vunpack.c.l.b16 %v403
      %v501 = vpack.c.b16 %v497, %v496
      %v502 = vpack.c.b16 %v499, %v498
      %v503 = vpack.c.b16 %v500, %v500
      %vm506 = vcmask 293888
      %v508 = vsel %vm506, %v475, 0
      %v511 = vsel %vm506, %v476, 0
      %v514 = vsel %vm506, %v477, 0
      %v517 = vsel %vm506, %v478, 0
      %v520 = vsel %vm506, %v479, 0
      %v523 = vsel %vm506, %v480, 0
      %v526 = vsel %vm506, %v481, 0
      %v529 = vsel %vm506, %v482, 0
      %v532 = vsel %vm506, %v483, 0
      %v535 = vsel %vm506, %v484, 0
      %v538 = vsel %vm506, %v485, 0
      %v541 = vsel %vm506, %v486, 0
      %v544 = vsel %vm506, %v487, 0
      %v547 = vsel %vm506, %v488, 0
      %v550 = vsel %vm506, %v489, 0
      %v553 = vsel %vm506, %v490, 0
      %vm555 = vcmask 1041408
      %v557 = vsel %vm555, %v503, 0
      %559 = vmatprep.subr.bf16.mxu0 0
      %560 = vmatpush1.bf16.msra.mxu0 0
      %561 = vmatprep.subr.bf16.mxu0 0
      %562 = vmatpush1.bf16.msra.mxu0 0
      %563 = vmatprep.subr.bf16.mxu0 0
      %564 = vmatpush1.bf16.msra.mxu0 0
      %565 = vmatprep.subr.bf16.mxu0 0
      %566 = vmatpush1.bf16.msra.mxu0 0
      %567 = vmatprep.subr.bf16.mxu0 0
      %568 = vmatpush1.bf16.msra.mxu0 0
      %569 = vmatprep.subr.bf16.mxu0 0
      %570 = vmatpush1.bf16.msra.mxu0 %v557
      %571 = vmatprep.subr.bf16.mxu0 0
      %572 = vmatpush1.bf16.msra.mxu0 %v502
      %573 = vmatprep.subr.bf16.mxu0 0
      %574 = vmatpush1.bf16.msra.mxu0 %v501
      %575 = vmatprep.subr.bf16.mxu0 0
      %576 = vmatpush2.bf16.msra.mxu0 0
      %577 = vmatprep.subr.bf16.mxu0 0
      %578 = vmatpush2.bf16.msra.mxu0 0
      %579 = vmatprep.subr.bf16.mxu0 0
      %580 = vmatpush2.bf16.msra.mxu0 0
      %581 = vmatprep.subr.bf16.mxu0 0
      %582 = vmatpush2.bf16.msra.mxu0 0
      %583 = vmatprep.subr.bf16.mxu0 0
      %584 = vmatpush2.bf16.msra.mxu0 0
      %585 = vmatprep.subr.bf16.mxu0 0
      %586 = vmatpush2.bf16.msra.mxu0 0
      %587 = vmatprep.subr.bf16.mxu0 0
      %588 = vmatpush2.bf16.msra.mxu0 0
      %589 = vmatprep.subr.bf16.mxu0 0
      %590 = vmatpush2.bf16.msra.mxu0 0
      %591 = vmatprep.mubr.bf16.mxu0 0
      %592 = vmatmul.mubr.bf16.gmra.mxu0 %v508
      %v593 = vpop.f32.mrf.mxu0
      %v594 = vadd.f32 %v409, %v593
      %v595 = vpop.f32.mrf.mxu0
      %v596 = vpop.f32.mrf.mxu0
      %v597 = vadd.f32 %v409, %v596
      %v598 = vpop.f32.mrf.mxu0
      %599 = vmatprep.mubr.bf16.mxu0 0
      %600 = vmatmul.mubr.bf16.gmra.mxu0 %v511
      %v601 = vpop.f32.mrf.mxu0
      %v602 = vadd.f32 %v409, %v601
      %v603 = vpop.f32.mrf.mxu0
      %v604 = vpop.f32.mrf.mxu0
      %v605 = vadd.f32 %v409, %v604
      %v606 = vpop.f32.mrf.mxu0
      %607 = vmatprep.mubr.bf16.mxu0 0
      %608 = vmatmul.mubr.bf16.gmra.mxu0 %v514
      %v609 = vpop.f32.mrf.mxu0
      %v610 = vadd.f32 %v409, %v609
      %v611 = vpop.f32.mrf.mxu0
      %v612 = vpop.f32.mrf.mxu0
      %v613 = vadd.f32 %v409, %v612
      %v614 = vpop.f32.mrf.mxu0
      %615 = vmatprep.mubr.bf16.mxu0 0
      %616 = vmatmul.mubr.bf16.gmra.mxu0 %v517
      %v617 = vpop.f32.mrf.mxu0
      %v618 = vadd.f32 %v409, %v617
      %v619 = vpop.f32.mrf.mxu0
      %v620 = vpop.f32.mrf.mxu0
      %v621 = vadd.f32 %v409, %v620
      %v622 = vpop.f32.mrf.mxu0
      %623 = vmatprep.mubr.bf16.mxu0 0
      %624 = vmatmul.mubr.bf16.gmra.mxu0 %v520
      %v625 = vpop.f32.mrf.mxu0
      %v626 = vadd.f32 %v409, %v625
      %v627 = vpop.f32.mrf.mxu0
      %v628 = vpop.f32.mrf.mxu0
      %v629 = vadd.f32 %v409, %v628
      %v630 = vpop.f32.mrf.mxu0
      %631 = vmatprep.mubr.bf16.mxu0 0
      %632 = vmatmul.mubr.bf16.gmra.mxu0 %v523
      %v633 = vpop.f32.mrf.mxu0
      %v634 = vadd.f32 %v409, %v633
      %v635 = vpop.f32.mrf.mxu0
      %v636 = vpop.f32.mrf.mxu0
      %v637 = vadd.f32 %v409, %v636
      %v638 = vpop.f32.mrf.mxu0
      %639 = vmatprep.mubr.bf16.mxu0 0
      %640 = vmatmul.mubr.bf16.gmra.mxu0 %v526
      %v641 = vpop.f32.mrf.mxu0
      %v642 = vadd.f32 %v409, %v641
      %v643 = vpop.f32.mrf.mxu0
      %v644 = vpop.f32.mrf.mxu0
      %v645 = vadd.f32 %v409, %v644
      %v646 = vpop.f32.mrf.mxu0
      %647 = vmatprep.mubr.bf16.mxu0 0
      %648 = vmatmul.mubr.bf16.gmra.mxu0 %v529
      %v649 = vpop.f32.mrf.mxu0
      %v650 = vadd.f32 %v409, %v649
      %v651 = vpop.f32.mrf.mxu0
      %v652 = vpop.f32.mrf.mxu0
      %v653 = vadd.f32 %v409, %v652
      %v654 = vpop.f32.mrf.mxu0
      %655 = vmatprep.mubr.bf16.mxu0 0
      %656 = vmatmul.mubr.bf16.gmra.mxu0 %v532
      %v657 = vpop.f32.mrf.mxu0
      %v658 = vadd.f32 %v409, %v657
      %v659 = vpop.f32.mrf.mxu0
      %v660 = vpop.f32.mrf.mxu0
      %v661 = vadd.f32 %v409, %v660
      %v662 = vpop.f32.mrf.mxu0
      %663 = vmatprep.mubr.bf16.mxu0 0
      %664 = vmatmul.mubr.bf16.gmra.mxu0 %v535
      %v665 = vpop.f32.mrf.mxu0
      %v666 = vadd.f32 %v409, %v665
      %v667 = vpop.f32.mrf.mxu0
      %v668 = vpop.f32.mrf.mxu0
      %v669 = vadd.f32 %v409, %v668
      %v670 = vpop.f32.mrf.mxu0
      %671 = vmatprep.mubr.bf16.mxu0 0
      %672 = vmatmul.mubr.bf16.gmra.mxu0 %v538
      %v673 = vpop.f32.mrf.mxu0
      %v674 = vadd.f32 %v409, %v673
      %v675 = vpop.f32.mrf.mxu0
      %v676 = vpop.f32.mrf.mxu0
      %v677 = vadd.f32 %v409, %v676
      %v678 = vpop.f32.mrf.mxu0
      %679 = vmatprep.mubr.bf16.mxu0 0
      %680 = vmatmul.mubr.bf16.gmra.mxu0 %v541
      %v681 = vpop.f32.mrf.mxu0
      %v682 = vadd.f32 %v409, %v681
      %v683 = vpop.f32.mrf.mxu0
      %v684 = vpop.f32.mrf.mxu0
      %v685 = vadd.f32 %v409, %v684
      %v686 = vpop.f32.mrf.mxu0
      %687 = vmatprep.mubr.bf16.mxu0 0
      %688 = vmatmul.mubr.bf16.gmra.mxu0 %v544
      %v689 = vpop.f32.mrf.mxu0
      %v690 = vadd.f32 %v409, %v689
      %v691 = vpop.f32.mrf.mxu0
      %v692 = vpop.f32.mrf.mxu0
      %v693 = vadd.f32 %v409, %v692
      %v694 = vpop.f32.mrf.mxu0
      %695 = vmatprep.mubr.bf16.mxu0 0
      %696 = vmatmul.mubr.bf16.gmra.mxu0 %v547
      %v697 = vpop.f32.mrf.mxu0
      %v698 = vadd.f32 %v409, %v697
      %v699 = vpop.f32.mrf.mxu0
      %v700 = vpop.f32.mrf.mxu0
      %v701 = vadd.f32 %v409, %v700
      %v702 = vpop.f32.mrf.mxu0
      %703 = vmatprep.mubr.bf16.mxu0 0
      %704 = vmatmul.mubr.bf16.gmra.mxu0 %v550
      %v705 = vpop.f32.mrf.mxu0
      %v706 = vadd.f32 %v409, %v705
      %v707 = vpop.f32.mrf.mxu0
      %v708 = vpop.f32.mrf.mxu0
      %v709 = vadd.f32 %v409, %v708
      %v710 = vpop.f32.mrf.mxu0
      %711 = vmatprep.mubr.bf16.mxu0 0
      %712 = vmatmul.mubr.bf16.gmra.mxu0 %v553
      %v713 = vpop.f32.mrf.mxu0
      %v714 = vadd.f32 %v409, %v713
      %v715 = vpop.f32.mrf.mxu0
      %v716 = vpop.f32.mrf.mxu0
      %v717 = vadd.f32 %v409, %v716
      %v718 = vpop.f32.mrf.mxu0
      %719 = vdwg.mxu0
      %v720 = vmax.f32 %v594, 0.0
      %v721 = vmax.f32 %v597, 0.0
      %v722 = vmax.f32 %v602, 0.0
      %v723 = vmax.f32 %v605, 0.0
      %v724 = vmax.f32 %v610, 0.0
      %v725 = vmax.f32 %v613, 0.0
      %v726 = vmax.f32 %v618, 0.0
      %v727 = vmax.f32 %v621, 0.0
      %v728 = vmax.f32 %v626, 0.0
      %v729 = vmax.f32 %v629, 0.0
      %v730 = vmax.f32 %v634, 0.0
      %v731 = vmax.f32 %v637, 0.0
      %v732 = vmax.f32 %v642, 0.0
      %v733 = vmax.f32 %v645, 0.0
      %v734 = vmax.f32 %v650, 0.0
      %v735 = vmax.f32 %v653, 0.0
      %v736 = vmax.f32 %v658, 0.0
      %v737 = vmax.f32 %v661, 0.0
      %v738 = vmax.f32 %v666, 0.0
      %v739 = vmax.f32 %v669, 0.0
      %v740 = vmax.f32 %v674, 0.0
      %v741 = vmax.f32 %v677, 0.0
      %v742 = vmax.f32 %v682, 0.0
      %v743 = vmax.f32 %v685, 0.0
      %v744 = vmax.f32 %v690, 0.0
      %v745 = vmax.f32 %v693, 0.0
      %v746 = vmax.f32 %v698, 0.0
      %v747 = vmax.f32 %v701, 0.0
      %v748 = vmax.f32 %v706, 0.0
      %v749 = vmax.f32 %v709, 0.0
      %v750 = vmax.f32 %v714, 0.0
      %v751 = vmax.f32 %v717, 0.0
      %vm784 = vcmask 1040384
      %v785 = vrot.slane %v720, 7
      %v786 = vrot.slane %v721, 7
      %v787 = vsel %vm784, %v785, %v786
      %v788 = vrot.slane %v722, 7
      %v789 = vrot.slane %v723, 7
      %v790 = vsel %vm784, %v788, %v789
      %v791 = vrot.slane %v724, 7
      %v792 = vrot.slane %v725, 7
      %v793 = vsel %vm784, %v791, %v792
      %v794 = vrot.slane %v726, 7
      %v795 = vrot.slane %v727, 7
      %v796 = vsel %vm784, %v794, %v795
      %v797 = vrot.slane %v728, 7
      %v798 = vrot.slane %v729, 7
      %v799 = vsel %vm784, %v797, %v798
      %v800 = vrot.slane %v730, 7
      %v801 = vrot.slane %v731, 7
      %v802 = vsel %vm784, %v800, %v801
      %v803 = vrot.slane %v732, 7
      %v804 = vrot.slane %v733, 7
      %v805 = vsel %vm784, %v803, %v804
      %v806 = vrot.slane %v734, 7
      %v807 = vrot.slane %v735, 7
      %v808 = vsel %vm784, %v806, %v807
      %v809 = vrot.slane %v736, 7
      %v810 = vrot.slane %v737, 7
      %v811 = vsel %vm784, %v809, %v810
      %v812 = vrot.slane %v738, 7
      %v813 = vrot.slane %v739, 7
      %v814 = vsel %vm784, %v812, %v813
      %v815 = vrot.slane %v740, 7
      %v816 = vrot.slane %v741, 7
      %v817 = vsel %vm784, %v815, %v816
      %v818 = vrot.slane %v742, 7
      %v819 = vrot.slane %v743, 7
      %v820 = vsel %vm784, %v818, %v819
      %v821 = vrot.slane %v744, 7
      %v822 = vrot.slane %v745, 7
      %v823 = vsel %vm784, %v821, %v822
      %v824 = vrot.slane %v746, 7
      %v825 = vrot.slane %v747, 7
      %v826 = vsel %vm784, %v824, %v825
      %v827 = vrot.slane %v748, 7
      %v828 = vrot.slane %v749, 7
      %v829 = vsel %vm784, %v827, %v828
      %v830 = vrot.slane %v750, 7
      %v831 = vrot.slane %v751, 7
      %v832 = vsel %vm784, %v830, %v831
      %v881 = vsel %vm784, 0.0, %v785
      %v882 = vsel %vm784, 0.0, %v788
      %v883 = vsel %vm784, 0.0, %v791
      %v884 = vsel %vm784, 0.0, %v794
      %v885 = vsel %vm784, 0.0, %v797
      %v886 = vsel %vm784, 0.0, %v800
      %v887 = vsel %vm784, 0.0, %v803
      %v888 = vsel %vm784, 0.0, %v806
      %v889 = vsel %vm784, 0.0, %v809
      %v890 = vsel %vm784, 0.0, %v812
      %v891 = vsel %vm784, 0.0, %v815
      %v892 = vsel %vm784, 0.0, %v818
      %v893 = vsel %vm784, 0.0, %v821
      %v894 = vsel %vm784, 0.0, %v824
      %v895 = vsel %vm784, 0.0, %v827
      %v896 = vsel %vm784, 0.0, %v830
      %v897 = vsel %vm784, %v786, 0.0
      %v898 = vsel %vm784, %v789, 0.0
      %v899 = vsel %vm784, %v792, 0.0
      %v900 = vsel %vm784, %v795, 0.0
      %v901 = vsel %vm784, %v798, 0.0
      %v902 = vsel %vm784, %v801, 0.0
      %v903 = vsel %vm784, %v804, 0.0
      %v904 = vsel %vm784, %v807, 0.0
      %v905 = vsel %vm784, %v810, 0.0
      %v906 = vsel %vm784, %v813, 0.0
      %v907 = vsel %vm784, %v816, 0.0
      %v908 = vsel %vm784, %v819, 0.0
      %v909 = vsel %vm784, %v822, 0.0
      %v910 = vsel %vm784, %v825, 0.0
      %v911 = vsel %vm784, %v828, 0.0
      %v912 = vsel %vm784, %v831, 0.0
      %vm944 = vcmask 1046528
      %v945 = vrot.slane 0.0, 1
      %v946 = vsel %vm944, %v945, %v945
      %v947 = vrot.slane %v881, 1
      %v948 = vrot.slane %v787, 1
      %v949 = vsel %vm944, %v947, %v948
      %v950 = vrot.slane %v897, 1
      %v951 = vsel %vm944, %v948, %v950
      %v952 = vrot.slane %v882, 1
      %v953 = vrot.slane %v790, 1
      %v954 = vsel %vm944, %v952, %v953
      %v955 = vrot.slane %v898, 1
      %v956 = vsel %vm944, %v953, %v955
      %v957 = vrot.slane %v883, 1
      %v958 = vrot.slane %v793, 1
      %v959 = vsel %vm944, %v957, %v958
      %v960 = vrot.slane %v899, 1
      %v961 = vsel %vm944, %v958, %v960
      %v962 = vrot.slane %v884, 1
      %v963 = vrot.slane %v796, 1
      %v964 = vsel %vm944, %v962, %v963
      %v965 = vrot.slane %v900, 1
      %v966 = vsel %vm944, %v963, %v965
      %v967 = vrot.slane %v885, 1
      %v968 = vrot.slane %v799, 1
      %v969 = vsel %vm944, %v967, %v968
      %v970 = vrot.slane %v901, 1
      %v971 = vsel %vm944, %v968, %v970
      %v972 = vrot.slane %v886, 1
      %v973 = vrot.slane %v802, 1
      %v974 = vsel %vm944, %v972, %v973
      %v975 = vrot.slane %v902, 1
      %v976 = vsel %vm944, %v973, %v975
      %v977 = vrot.slane %v887, 1
      %v978 = vrot.slane %v805, 1
      %v979 = vsel %vm944, %v977, %v978
      %v980 = vrot.slane %v903, 1
      %v981 = vsel %vm944, %v978, %v980
      %v982 = vrot.slane %v888, 1
      %v983 = vrot.slane %v808, 1
      %v984 = vsel %vm944, %v982, %v983
      %v985 = vrot.slane %v904, 1
      %v986 = vsel %vm944, %v983, %v985
      %v987 = vrot.slane %v889, 1
      %v988 = vrot.slane %v811, 1
      %v989 = vsel %vm944, %v987, %v988
      %v990 = vrot.slane %v905, 1
      %v991 = vsel %vm944, %v988, %v990
      %v992 = vrot.slane %v890, 1
      %v993 = vrot.slane %v814, 1
      %v994 = vsel %vm944, %v992, %v993
      %v995 = vrot.slane %v906, 1
      %v996 = vsel %vm944, %v993, %v995
      %v997 = vrot.slane %v891, 1
      %v998 = vrot.slane %v817, 1
      %v999 = vsel %vm944, %v997, %v998
      %v1000 = vrot.slane %v907, 1
      %v1001 = vsel %vm944, %v998, %v1000
      %v1002 = vrot.slane %v892, 1
      %v1003 = vrot.slane %v820, 1
      %v1004 = vsel %vm944, %v1002, %v1003
      %v1005 = vrot.slane %v908, 1
      %v1006 = vsel %vm944, %v1003, %v1005
      %v1007 = vrot.slane %v893, 1
      %v1008 = vrot.slane %v823, 1
      %v1009 = vsel %vm944, %v1007, %v1008
      %v1010 = vrot.slane %v909, 1
      %v1011 = vsel %vm944, %v1008, %v1010
      %v1012 = vrot.slane %v894, 1
      %v1013 = vrot.slane %v826, 1
      %v1014 = vsel %vm944, %v1012, %v1013
      %v1015 = vrot.slane %v910, 1
      %v1016 = vsel %vm944, %v1013, %v1015
      %v1017 = vrot.slane %v895, 1
      %v1018 = vrot.slane %v829, 1
      %v1019 = vsel %vm944, %v1017, %v1018
      %v1020 = vrot.slane %v911, 1
      %v1021 = vsel %vm944, %v1018, %v1020
      %1022 = vrot.lane.b32.xlu0 %v946, 8
      %v1023 = vpop.permute.xlu0 %1022
      %1024 = vrot.lane.b32.xlu0 %v949, 8
      %v1025 = vpop.permute.xlu0 %1024
      %1026 = vrot.lane.b32.xlu0 %v951, 8
      %v1027 = vpop.permute.xlu0 %1026
      %1028 = vrot.lane.b32.xlu0 %v954, 8
      %v1029 = vpop.permute.xlu0 %1028
      %1030 = vrot.lane.b32.xlu0 %v956, 8
      %v1031 = vpop.permute.xlu0 %1030
      %1032 = vrot.lane.b32.xlu0 %v959, 8
      %v1033 = vpop.permute.xlu0 %1032
      %1034 = vrot.lane.b32.xlu0 %v961, 8
      %v1035 = vpop.permute.xlu0 %1034
      %1036 = vrot.lane.b32.xlu0 %v964, 8
      %v1037 = vpop.permute.xlu0 %1036
      %1038 = vrot.lane.b32.xlu0 %v966, 8
      %v1039 = vpop.permute.xlu0 %1038
      %1040 = vrot.lane.b32.xlu0 %v969, 8
      %v1041 = vpop.permute.xlu0 %1040
      %1042 = vrot.lane.b32.xlu0 %v971, 8
      %v1043 = vpop.permute.xlu0 %1042
      %1044 = vrot.lane.b32.xlu0 %v974, 8
      %v1045 = vpop.permute.xlu0 %1044
      %1046 = vrot.lane.b32.xlu0 %v976, 8
      %v1047 = vpop.permute.xlu0 %1046
      %1048 = vrot.lane.b32.xlu0 %v979, 8
      %v1049 = vpop.permute.xlu0 %1048
      %1050 = vrot.lane.b32.xlu0 %v981, 8
      %v1051 = vpop.permute.xlu0 %1050
      %1052 = vrot.lane.b32.xlu0 %v984, 8
      %v1053 = vpop.permute.xlu0 %1052
      %1054 = vrot.lane.b32.xlu0 %v986, 8
      %v1055 = vpop.permute.xlu0 %1054
      %1056 = vrot.lane.b32.xlu0 %v989, 8
      %v1057 = vpop.permute.xlu0 %1056
      %1058 = vrot.lane.b32.xlu0 %v991, 8
      %v1059 = vpop.permute.xlu0 %1058
      %1060 = vrot.lane.b32.xlu0 %v994, 8
      %v1061 = vpop.permute.xlu0 %1060
      %1062 = vrot.lane.b32.xlu0 %v996, 8
      %v1063 = vpop.permute.xlu0 %1062
      %1064 = vrot.lane.b32.xlu0 %v999, 8
      %v1065 = vpop.permute.xlu0 %1064
      %1066 = vrot.lane.b32.xlu0 %v1001, 8
      %v1067 = vpop.permute.xlu0 %1066
      %1068 = vrot.lane.b32.xlu0 %v1004, 8
      %v1069 = vpop.permute.xlu0 %1068
      %1070 = vrot.lane.b32.xlu0 %v1006, 8
      %v1071 = vpop.permute.xlu0 %1070
      %1072 = vrot.lane.b32.xlu0 %v1009, 8
      %v1073 = vpop.permute.xlu0 %1072
      %1074 = vrot.lane.b32.xlu0 %v1011, 8
      %v1075 = vpop.permute.xlu0 %1074
      %1076 = vrot.lane.b32.xlu0 %v1014, 8
      %v1077 = vpop.permute.xlu0 %1076
      %1078 = vrot.lane.b32.xlu0 %v1016, 8
      %v1079 = vpop.permute.xlu0 %1078
      %1080 = vrot.lane.b32.xlu0 %v1019, 8
      %v1081 = vpop.permute.xlu0 %1080
      %1082 = vrot.lane.b32.xlu0 %v1021, 8
      %v1083 = vpop.permute.xlu0 %1082
      %vm1115 = vcmask 1045504
      %v1116 = vrot.slane 0.0, 2
      %v1117 = vsel %vm1115, %v1116, %v1116
      %v1118 = vrot.slane %v881, 2
      %v1119 = vrot.slane %v787, 2
      %v1120 = vsel %vm1115, %v1118, %v1119
      %v1121 = vrot.slane %v897, 2
      %v1122 = vsel %vm1115, %v1119, %v1121
      %v1123 = vrot.slane %v882, 2
      %v1124 = vrot.slane %v790, 2
      %v1125 = vsel %vm1115, %v1123, %v1124
      %v1126 = vrot.slane %v898, 2
      %v1127 = vsel %vm1115, %v1124, %v1126
      %v1128 = vrot.slane %v883, 2
      %v1129 = vrot.slane %v793, 2
      %v1130 = vsel %vm1115, %v1128, %v1129
      %v1131 = vrot.slane %v899, 2
      %v1132 = vsel %vm1115, %v1129, %v1131
      %v1133 = vrot.slane %v884, 2
      %v1134 = vrot.slane %v796, 2
      %v1135 = vsel %vm1115, %v1133, %v1134
      %v1136 = vrot.slane %v900, 2
      %v1137 = vsel %vm1115, %v1134, %v1136
      %v1138 = vrot.slane %v885, 2
      %v1139 = vrot.slane %v799, 2
      %v1140 = vsel %vm1115, %v1138, %v1139
      %v1141 = vrot.slane %v901, 2
      %v1142 = vsel %vm1115, %v1139, %v1141
      %v1143 = vrot.slane %v886, 2
      %v1144 = vrot.slane %v802, 2
      %v1145 = vsel %vm1115, %v1143, %v1144
      %v1146 = vrot.slane %v902, 2
      %v1147 = vsel %vm1115, %v1144, %v1146
      %v1148 = vrot.slane %v887, 2
      %v1149 = vrot.slane %v805, 2
      %v1150 = vsel %vm1115, %v1148, %v1149
      %v1151 = vrot.slane %v903, 2
      %v1152 = vsel %vm1115, %v1149, %v1151
      %v1153 = vrot.slane %v888, 2
      %v1154 = vrot.slane %v808, 2
      %v1155 = vsel %vm1115, %v1153, %v1154
      %v1156 = vrot.slane %v904, 2
      %v1157 = vsel %vm1115, %v1154, %v1156
      %v1158 = vrot.slane %v889, 2
      %v1159 = vrot.slane %v811, 2
      %v1160 = vsel %vm1115, %v1158, %v1159
      %v1161 = vrot.slane %v905, 2
      %v1162 = vsel %vm1115, %v1159, %v1161
      %v1163 = vrot.slane %v890, 2
      %v1164 = vrot.slane %v814, 2
      %v1165 = vsel %vm1115, %v1163, %v1164
      %v1166 = vrot.slane %v906, 2
      %v1167 = vsel %vm1115, %v1164, %v1166
      %v1168 = vrot.slane %v891, 2
      %v1169 = vrot.slane %v817, 2
      %v1170 = vsel %vm1115, %v1168, %v1169
      %v1171 = vrot.slane %v907, 2
      %v1172 = vsel %vm1115, %v1169, %v1171
      %v1173 = vrot.slane %v892, 2
      %v1174 = vrot.slane %v820, 2
      %v1175 = vsel %vm1115, %v1173, %v1174
      %v1176 = vrot.slane %v908, 2
      %v1177 = vsel %vm1115, %v1174, %v1176
      %v1178 = vrot.slane %v893, 2
      %v1179 = vrot.slane %v823, 2
      %v1180 = vsel %vm1115, %v1178, %v1179
      %v1181 = vrot.slane %v909, 2
      %v1182 = vsel %vm1115, %v1179, %v1181
      %v1183 = vrot.slane %v894, 2
      %v1184 = vrot.slane %v826, 2
      %v1185 = vsel %vm1115, %v1183, %v1184
      %v1186 = vrot.slane %v910, 2
      %v1187 = vsel %vm1115, %v1184, %v1186
      %v1188 = vrot.slane %v895, 2
      %v1189 = vrot.slane %v829, 2
      %v1190 = vsel %vm1115, %v1188, %v1189
      %v1191 = vrot.slane %v911, 2
      %v1192 = vsel %vm1115, %v1189, %v1191
      %1193 = vrot.lane.b32.xlu0 %v1117, 16
      %v1194 = vpop.permute.xlu0 %1193
      %1195 = vrot.lane.b32.xlu0 %v1120, 16
      %v1196 = vpop.permute.xlu0 %1195
      %1197 = vrot.lane.b32.xlu0 %v1122, 16
      %v1198 = vpop.permute.xlu0 %1197
      %1199 = vrot.lane.b32.xlu0 %v1125, 16
      %v1200 = vpop.permute.xlu0 %1199
      %1201 = vrot.lane.b32.xlu0 %v1127, 16
      %v1202 = vpop.permute.xlu0 %1201
      %1203 = vrot.lane.b32.xlu0 %v1130, 16
      %v1204 = vpop.permute.xlu0 %1203
      %1205 = vrot.lane.b32.xlu0 %v1132, 16
      %v1206 = vpop.permute.xlu0 %1205
      %1207 = vrot.lane.b32.xlu0 %v1135, 16
      %v1208 = vpop.permute.xlu0 %1207
      %1209 = vrot.lane.b32.xlu0 %v1137, 16
      %v1210 = vpop.permute.xlu0 %1209
      %1211 = vrot.lane.b32.xlu0 %v1140, 16
      %v1212 = vpop.permute.xlu0 %1211
      %1213 = vrot.lane.b32.xlu0 %v1142, 16
      %v1214 = vpop.permute.xlu0 %1213
      %1215 = vrot.lane.b32.xlu0 %v1145, 16
      %v1216 = vpop.permute.xlu0 %1215
      %1217 = vrot.lane.b32.xlu0 %v1147, 16
      %v1218 = vpop.permute.xlu0 %1217
      %1219 = vrot.lane.b32.xlu0 %v1150, 16
      %v1220 = vpop.permute.xlu0 %1219
      %1221 = vrot.lane.b32.xlu0 %v1152, 16
      %v1222 = vpop.permute.xlu0 %1221
      %1223 = vrot.lane.b32.xlu0 %v1155, 16
      %v1224 = vpop.permute.xlu0 %1223
      %1225 = vrot.lane.b32.xlu0 %v1157, 16
      %v1226 = vpop.permute.xlu0 %1225
      %1227 = vrot.lane.b32.xlu0 %v1160, 16
      %v1228 = vpop.permute.xlu0 %1227
      %1229 = vrot.lane.b32.xlu0 %v1162, 16
      %v1230 = vpop.permute.xlu0 %1229
      %1231 = vrot.lane.b32.xlu0 %v1165, 16
      %v1232 = vpop.permute.xlu0 %1231
      %1233 = vrot.lane.b32.xlu0 %v1167, 16
      %v1234 = vpop.permute.xlu0 %1233
      %1235 = vrot.lane.b32.xlu0 %v1170, 16
      %v1236 = vpop.permute.xlu0 %1235
      %1237 = vrot.lane.b32.xlu0 %v1172, 16
      %v1238 = vpop.permute.xlu0 %1237
      %1239 = vrot.lane.b32.xlu0 %v1175, 16
      %v1240 = vpop.permute.xlu0 %1239
      %1241 = vrot.lane.b32.xlu0 %v1177, 16
      %v1242 = vpop.permute.xlu0 %1241
      %1243 = vrot.lane.b32.xlu0 %v1180, 16
      %v1244 = vpop.permute.xlu0 %1243
      %1245 = vrot.lane.b32.xlu0 %v1182, 16
      %v1246 = vpop.permute.xlu0 %1245
      %1247 = vrot.lane.b32.xlu0 %v1185, 16
      %v1248 = vpop.permute.xlu0 %1247
      %1249 = vrot.lane.b32.xlu0 %v1187, 16
      %v1250 = vpop.permute.xlu0 %1249
      %1251 = vrot.lane.b32.xlu0 %v1190, 16
      %v1252 = vpop.permute.xlu0 %1251
      %1253 = vrot.lane.b32.xlu0 %v1192, 16
      %v1254 = vpop.permute.xlu0 %1253
      %vm1286 = vcmask 64512
      %v1287 = vsel %vm1286, 0.0, %v1023
      %v1288 = vsel %vm1286, %v881, %v1025
      %v1289 = vsel %vm1286, %v787, %v1027
      %v1290 = vsel %vm1286, %v882, %v1029
      %v1291 = vsel %vm1286, %v790, %v1031
      %v1292 = vsel %vm1286, %v883, %v1033
      %v1293 = vsel %vm1286, %v793, %v1035
      %v1294 = vsel %vm1286, %v884, %v1037
      %v1295 = vsel %vm1286, %v796, %v1039
      %v1296 = vsel %vm1286, %v885, %v1041
      %v1297 = vsel %vm1286, %v799, %v1043
      %v1298 = vsel %vm1286, %v886, %v1045
      %v1299 = vsel %vm1286, %v802, %v1047
      %v1300 = vsel %vm1286, %v887, %v1049
      %v1301 = vsel %vm1286, %v805, %v1051
      %v1302 = vsel %vm1286, %v888, %v1053
      %v1303 = vsel %vm1286, %v808, %v1055
      %v1304 = vsel %vm1286, %v889, %v1057
      %v1305 = vsel %vm1286, %v811, %v1059
      %v1306 = vsel %vm1286, %v890, %v1061
      %v1307 = vsel %vm1286, %v814, %v1063
      %v1308 = vsel %vm1286, %v891, %v1065
      %v1309 = vsel %vm1286, %v817, %v1067
      %v1310 = vsel %vm1286, %v892, %v1069
      %v1311 = vsel %vm1286, %v820, %v1071
      %v1312 = vsel %vm1286, %v893, %v1073
      %v1313 = vsel %vm1286, %v823, %v1075
      %v1314 = vsel %vm1286, %v894, %v1077
      %v1315 = vsel %vm1286, %v826, %v1079
      %v1316 = vsel %vm1286, %v895, %v1081
      %v1317 = vsel %vm1286, %v829, %v1083
      %vm1318 = vcmask 130048
      %v1319 = vsel %vm1318, %v1287, %v1194
      %v1320 = vsel %vm1318, %v1288, %v1196
      %v1321 = vsel %vm1318, %v1289, %v1198
      %v1322 = vsel %vm1318, %v1290, %v1200
      %v1323 = vsel %vm1318, %v1291, %v1202
      %v1324 = vsel %vm1318, %v1292, %v1204
      %v1325 = vsel %vm1318, %v1293, %v1206
      %v1326 = vsel %vm1318, %v1294, %v1208
      %v1327 = vsel %vm1318, %v1295, %v1210
      %v1328 = vsel %vm1318, %v1296, %v1212
      %v1329 = vsel %vm1318, %v1297, %v1214
      %v1330 = vsel %vm1318, %v1298, %v1216
      %v1331 = vsel %vm1318, %v1299, %v1218
      %v1332 = vsel %vm1318, %v1300, %v1220
      %v1333 = vsel %vm1318, %v1301, %v1222
      %v1334 = vsel %vm1318, %v1302, %v1224
      %v1335 = vsel %vm1318, %v1303, %v1226
      %v1336 = vsel %vm1318, %v1304, %v1228
      %v1337 = vsel %vm1318, %v1305, %v1230
      %v1338 = vsel %vm1318, %v1306, %v1232
      %v1339 = vsel %vm1318, %v1307, %v1234
      %v1340 = vsel %vm1318, %v1308, %v1236
      %v1341 = vsel %vm1318, %v1309, %v1238
      %v1342 = vsel %vm1318, %v1310, %v1240
      %v1343 = vsel %vm1318, %v1311, %v1242
      %v1344 = vsel %vm1318, %v1312, %v1244
      %v1345 = vsel %vm1318, %v1313, %v1246
      %v1346 = vsel %vm1318, %v1314, %v1248
      %v1347 = vsel %vm1318, %v1315, %v1250
      %v1348 = vsel %vm1318, %v1316, %v1252
      %v1349 = vsel %vm1318, %v1317, %v1254
      %v1350 = vpack.c.bf16 %v1319, %v1319
      %v1351 = vpack.c.bf16 %v1321, %v1320
      %v1352 = vpack.c.bf16 %v1323, %v1322
      %v1353 = vpack.c.bf16 %v1325, %v1324
      %v1354 = vpack.c.bf16 %v1327, %v1326
      %v1355 = vpack.c.bf16 %v1329, %v1328
      %v1356 = vpack.c.bf16 %v1331, %v1330
      %v1357 = vpack.c.bf16 %v1333, %v1332
      %v1358 = vpack.c.bf16 %v1335, %v1334
      %v1359 = vpack.c.bf16 %v1337, %v1336
      %v1360 = vpack.c.bf16 %v1339, %v1338
      %v1361 = vpack.c.bf16 %v1341, %v1340
      %v1362 = vpack.c.bf16 %v1343, %v1342
      %v1363 = vpack.c.bf16 %v1345, %v1344
      %v1364 = vpack.c.bf16 %v1347, %v1346
      %v1365 = vpack.c.bf16 %v1349, %v1348
      %v1366 = vld [vmem:[%s3] sm:$0xf]
      %v1367 = vld [vmem:[%s3 + $0x4] sm:$0xf]
      %v1368 = vld [vmem:[%s3 + $0x8] sm:$0xf]
      %v1371 = vrot.slane %v896, 1
      %v1372 = vrot.slane %v832, 1
      %v1373 = vsel %vm944, %v1371, %v1372
      %v1374 = vrot.slane %v912, 1
      %v1375 = vsel %vm944, %v1372, %v1374
      %1376 = vrot.lane.b32.xlu0 %v1373, 8
      %v1377 = vpop.permute.xlu0 %1376
      %1378 = vrot.lane.b32.xlu0 %v1375, 8
      %v1379 = vpop.permute.xlu0 %1378
      %v1382 = vrot.slane %v896, 2
      %v1383 = vrot.slane %v832, 2
      %v1384 = vsel %vm1115, %v1382, %v1383
      %v1385 = vrot.slane %v912, 2
      %v1386 = vsel %vm1115, %v1383, %v1385
      %1387 = vrot.lane.b32.xlu0 %v1384, 16
      %v1388 = vpop.permute.xlu0 %1387
      %1389 = vrot.lane.b32.xlu0 %v1386, 16
      %v1390 = vpop.permute.xlu0 %1389
      %v1393 = vsel %vm1286, %v896, %v1377
      %v1394 = vsel %vm1286, %v832, %v1379
      %v1395 = vsel %vm1318, %v1393, %v1388
      %v1396 = vsel %vm1318, %v1394, %v1390
      %v1397 = vpack.c.bf16 %v1396, %v1395
      %s1398 = scalar_lea.vmem %s3, 12
      %v1399 = vld [vmem:[%s1398] sm:$0xf]
      %v1400 = vld [vmem:[%s1398 + $0x4] sm:$0xf]
      %v1401 = vld [vmem:[%s1398 + $0x8] sm:$0xf]
      %v1405 = vunpack.c.l.b16 %v1399
      %v1406 = vunpack.c.l.b16 %v1400
      %v1407 = vunpack.c.l.b16 %v1401
      %v1408 = vpack.c.b16 %v1406, %v1405
      %v1409 = vpack.c.b16 %v1407, %v1407
      %vm1411 = vcmask 195584
      %v1413 = vsel %vm1411, %v1351, 0
      %v1416 = vsel %vm1411, %v1352, 0
      %v1419 = vsel %vm1411, %v1353, 0
      %v1422 = vsel %vm1411, %v1354, 0
      %v1425 = vsel %vm1411, %v1355, 0
      %v1428 = vsel %vm1411, %v1356, 0
      %v1431 = vsel %vm1411, %v1357, 0
      %v1434 = vsel %vm1411, %v1358, 0
      %v1437 = vsel %vm1411, %v1359, 0
      %v1440 = vsel %vm1411, %v1360, 0
      %v1443 = vsel %vm1411, %v1361, 0
      %v1446 = vsel %vm1411, %v1362, 0
      %v1449 = vsel %vm1411, %v1363, 0
      %v1452 = vsel %vm1411, %v1364, 0
      %v1455 = vsel %vm1411, %v1365, 0
      %v1458 = vsel %vm1411, %v1397, 0
      %vm1460 = vcmask 1043456
      %v1462 = vsel %vm1460, %v1409, 0
      %1464 = vmatprep.subr.bf16.mxu0 0
      %1465 = vmatpush1.bf16.msra.mxu0 0
      %1466 = vmatprep.subr.bf16.mxu0 0
      %1467 = vmatpush1.bf16.msra.mxu0 0
      %1468 = vmatprep.subr.bf16.mxu0 0
      %1469 = vmatpush1.bf16.msra.mxu0 0
      %1470 = vmatprep.subr.bf16.mxu0 0
      %1471 = vmatpush1.bf16.msra.mxu0 0
      %1472 = vmatprep.subr.bf16.mxu0 0
      %1473 = vmatpush1.bf16.msra.mxu0 0
      %1474 = vmatprep.subr.bf16.mxu0 0
      %1475 = vmatpush1.bf16.msra.mxu0 0
      %1476 = vmatprep.subr.bf16.mxu0 0
      %1477 = vmatpush1.bf16.msra.mxu0 %v1462
      %1478 = vmatprep.subr.bf16.mxu0 0
      %1479 = vmatpush1.bf16.msra.mxu0 %v1408
      %1480 = vmatprep.subr.bf16.mxu0 0
      %1481 = vmatpush2.bf16.msra.mxu0 0
      %1482 = vmatprep.subr.bf16.mxu0 0
      %1483 = vmatpush2.bf16.msra.mxu0 0
      %1484 = vmatprep.subr.bf16.mxu0 0
      %1485 = vmatpush2.bf16.msra.mxu0 0
      %1486 = vmatprep.subr.bf16.mxu0 0
      %1487 = vmatpush2.bf16.msra.mxu0 0
      %1488 = vmatprep.subr.bf16.mxu0 0
      %1489 = vmatpush2.bf16.msra.mxu0 0
      %1490 = vmatprep.subr.bf16.mxu0 0
      %1491 = vmatpush2.bf16.msra.mxu0 0
      %1492 = vmatprep.subr.bf16.mxu0 0
      %1493 = vmatpush2.bf16.msra.mxu0 0
      %1494 = vmatprep.subr.bf16.mxu0 0
      %1495 = vmatpush2.bf16.msra.mxu0 0
      %1496 = vmatprep.mubr.bf16.mxu0 0
      %1497 = vmatmul.mubr.bf16.gmra.mxu0 %v1413
      %v1498 = vpop.f32.mrf.mxu0
      %v1499 = vadd.f32 0.0, %v1498
      %v1500 = vpop.f32.mrf.mxu0
      %v1501 = vpop.f32.mrf.mxu0
      %v1502 = vadd.f32 0.0, %v1501
      %v1503 = vpop.f32.mrf.mxu0
      %1504 = vmatprep.mubr.bf16.mxu0 0
      %1505 = vmatmul.mubr.bf16.gmra.mxu0 %v1416
      %v1506 = vpop.f32.mrf.mxu0
      %v1507 = vadd.f32 0.0, %v1506
      %v1508 = vpop.f32.mrf.mxu0
      %v1509 = vpop.f32.mrf.mxu0
      %v1510 = vadd.f32 0.0, %v1509
      %v1511 = vpop.f32.mrf.mxu0
      %1512 = vmatprep.mubr.bf16.mxu0 0
      %1513 = vmatmul.mubr.bf16.gmra.mxu0 %v1419
      %v1514 = vpop.f32.mrf.mxu0
      %v1515 = vadd.f32 0.0, %v1514
      %v1516 = vpop.f32.mrf.mxu0
      %v1517 = vpop.f32.mrf.mxu0
      %v1518 = vadd.f32 0.0, %v1517
      %v1519 = vpop.f32.mrf.mxu0
      %1520 = vmatprep.mubr.bf16.mxu0 0
      %1521 = vmatmul.mubr.bf16.gmra.mxu0 %v1422
      %v1522 = vpop.f32.mrf.mxu0
      %v1523 = vadd.f32 0.0, %v1522
      %v1524 = vpop.f32.mrf.mxu0
      %v1525 = vpop.f32.mrf.mxu0
      %v1526 = vadd.f32 0.0, %v1525
      %v1527 = vpop.f32.mrf.mxu0
      %1528 = vmatprep.mubr.bf16.mxu0 0
      %1529 = vmatmul.mubr.bf16.gmra.mxu0 %v1425
      %v1530 = vpop.f32.mrf.mxu0
      %v1531 = vadd.f32 0.0, %v1530
      %v1532 = vpop.f32.mrf.mxu0
      %v1533 = vpop.f32.mrf.mxu0
      %v1534 = vadd.f32 0.0, %v1533
      %v1535 = vpop.f32.mrf.mxu0
      %1536 = vmatprep.mubr.bf16.mxu0 0
      %1537 = vmatmul.mubr.bf16.gmra.mxu0 %v1428
      %v1538 = vpop.f32.mrf.mxu0
      %v1539 = vadd.f32 0.0, %v1538
      %v1540 = vpop.f32.mrf.mxu0
      %v1541 = vpop.f32.mrf.mxu0
      %v1542 = vadd.f32 0.0, %v1541
      %v1543 = vpop.f32.mrf.mxu0
      %1544 = vmatprep.mubr.bf16.mxu0 0
      %1545 = vmatmul.mubr.bf16.gmra.mxu0 %v1431
      %v1546 = vpop.f32.mrf.mxu0
      %v1547 = vadd.f32 0.0, %v1546
      %v1548 = vpop.f32.mrf.mxu0
      %v1549 = vpop.f32.mrf.mxu0
      %v1550 = vadd.f32 0.0, %v1549
      %v1551 = vpop.f32.mrf.mxu0
      %1552 = vmatprep.mubr.bf16.mxu0 0
      %1553 = vmatmul.mubr.bf16.gmra.mxu0 %v1434
      %v1554 = vpop.f32.mrf.mxu0
      %v1555 = vadd.f32 0.0, %v1554
      %v1556 = vpop.f32.mrf.mxu0
      %v1557 = vpop.f32.mrf.mxu0
      %v1558 = vadd.f32 0.0, %v1557
      %v1559 = vpop.f32.mrf.mxu0
      %1560 = vmatprep.mubr.bf16.mxu0 0
      %1561 = vmatmul.mubr.bf16.gmra.mxu0 %v1437
      %v1562 = vpop.f32.mrf.mxu0
      %v1563 = vadd.f32 0.0, %v1562
      %v1564 = vpop.f32.mrf.mxu0
      %v1565 = vpop.f32.mrf.mxu0
      %v1566 = vadd.f32 0.0, %v1565
      %v1567 = vpop.f32.mrf.mxu0
      %1568 = vmatprep.mubr.bf16.mxu0 0
      %1569 = vmatmul.mubr.bf16.gmra.mxu0 %v1440
      %v1570 = vpop.f32.mrf.mxu0
      %v1571 = vadd.f32 0.0, %v1570
      %v1572 = vpop.f32.mrf.mxu0
      %v1573 = vpop.f32.mrf.mxu0
      %v1574 = vadd.f32 0.0, %v1573
      %v1575 = vpop.f32.mrf.mxu0
      %1576 = vmatprep.mubr.bf16.mxu0 0
      %1577 = vmatmul.mubr.bf16.gmra.mxu0 %v1443
      %v1578 = vpop.f32.mrf.mxu0
      %v1579 = vadd.f32 0.0, %v1578
      %v1580 = vpop.f32.mrf.mxu0
      %v1581 = vpop.f32.mrf.mxu0
      %v1582 = vadd.f32 0.0, %v1581
      %v1583 = vpop.f32.mrf.mxu0
      %1584 = vmatprep.mubr.bf16.mxu0 0
      %1585 = vmatmul.mubr.bf16.gmra.mxu0 %v1446
      %v1586 = vpop.f32.mrf.mxu0
      %v1587 = vadd.f32 0.0, %v1586
      %v1588 = vpop.f32.mrf.mxu0
      %v1589 = vpop.f32.mrf.mxu0
      %v1590 = vadd.f32 0.0, %v1589
      %v1591 = vpop.f32.mrf.mxu0
      %1592 = vmatprep.mubr.bf16.mxu0 0
      %1593 = vmatmul.mubr.bf16.gmra.mxu0 %v1449
      %v1594 = vpop.f32.mrf.mxu0
      %v1595 = vadd.f32 0.0, %v1594
      %v1596 = vpop.f32.mrf.mxu0
      %v1597 = vpop.f32.mrf.mxu0
      %v1598 = vadd.f32 0.0, %v1597
      %v1599 = vpop.f32.mrf.mxu0
      %1600 = vmatprep.mubr.bf16.mxu0 0
      %1601 = vmatmul.mubr.bf16.gmra.mxu0 %v1452
      %v1602 = vpop.f32.mrf.mxu0
      %v1603 = vadd.f32 0.0, %v1602
      %v1604 = vpop.f32.mrf.mxu0
      %v1605 = vpop.f32.mrf.mxu0
      %v1606 = vadd.f32 0.0, %v1605
      %v1607 = vpop.f32.mrf.mxu0
      %1608 = vmatprep.mubr.bf16.mxu0 0
      %1609 = vmatmul.mubr.bf16.gmra.mxu0 %v1455
      %v1610 = vpop.f32.mrf.mxu0
      %v1611 = vadd.f32 0.0, %v1610
      %v1612 = vpop.f32.mrf.mxu0
      %v1613 = vpop.f32.mrf.mxu0
      %v1614 = vadd.f32 0.0, %v1613
      %v1615 = vpop.f32.mrf.mxu0
      %1616 = vmatprep.mubr.bf16.mxu0 0
      %1617 = vmatmul.mubr.bf16.gmra.mxu0 %v1458
      %v1618 = vpop.f32.mrf.mxu0
      %v1619 = vadd.f32 0.0, %v1618
      %v1620 = vpop.f32.mrf.mxu0
      %v1621 = vpop.f32.mrf.mxu0
      %v1622 = vadd.f32 0.0, %v1621
      %v1623 = vpop.f32.mrf.mxu0
      %1624 = vdwg.mxu0
      %v1628 = vunpack.c.l.b16 %v1366
      %v1629 = vunpack.c.l.b16 %v1367
      %v1630 = vunpack.c.l.b16 %v1368
      %v1631 = vpack.c.b16 %v1629, %v1628
      %v1632 = vpack.c.b16 %v1630, %v1630
      %v1635 = vsel %vm1411, %v1350, 0
      %v1638 = vsel %vm1460, %v1632, 0
      %1640 = vmatprep.subr.bf16.mxu0 0
      %1641 = vmatpush1.bf16.msra.mxu0 0
      %1642 = vmatprep.subr.bf16.mxu0 0
      %1643 = vmatpush1.bf16.msra.mxu0 0
      %1644 = vmatprep.subr.bf16.mxu0 0
      %1645 = vmatpush1.bf16.msra.mxu0 0
      %1646 = vmatprep.subr.bf16.mxu0 0
      %1647 = vmatpush1.bf16.msra.mxu0 0
      %1648 = vmatprep.subr.bf16.mxu0 0
      %1649 = vmatpush1.bf16.msra.mxu0 0
      %1650 = vmatprep.subr.bf16.mxu0 0
      %1651 = vmatpush1.bf16.msra.mxu0 0
      %1652 = vmatprep.subr.bf16.mxu0 0
      %1653 = vmatpush1.bf16.msra.mxu0 %v1638
      %1654 = vmatprep.subr.bf16.mxu0 0
      %1655 = vmatpush1.bf16.msra.mxu0 %v1631
      %1656 = vmatprep.subr.bf16.mxu0 0
      %1657 = vmatpush2.bf16.msra.mxu0 0
      %1658 = vmatprep.subr.bf16.mxu0 0
      %1659 = vmatpush2.bf16.msra.mxu0 0
      %1660 = vmatprep.subr.bf16.mxu0 0
      %1661 = vmatpush2.bf16.msra.mxu0 0
      %1662 = vmatprep.subr.bf16.mxu0 0
      %1663 = vmatpush2.bf16.msra.mxu0 0
      %1664 = vmatprep.subr.bf16.mxu0 0
      %1665 = vmatpush2.bf16.msra.mxu0 0
      %1666 = vmatprep.subr.bf16.mxu0 0
      %1667 = vmatpush2.bf16.msra.mxu0 0
      %1668 = vmatprep.subr.bf16.mxu0 0
      %1669 = vmatpush2.bf16.msra.mxu0 0
      %1670 = vmatprep.subr.bf16.mxu0 0
      %1671 = vmatpush2.bf16.msra.mxu0 0
      %1672 = vmatprep.mubr.bf16.mxu0 0
      %1673 = vmatmul.mubr.bf16.gmra.mxu0 %v1635
      %v1674 = vpop.f32.mrf.mxu0
      %v1675 = vadd.f32 %v1499, %v1674
      %v1676 = vpop.f32.mrf.mxu0
      %v1677 = vpop.f32.mrf.mxu0
      %v1678 = vadd.f32 %v1502, %v1677
      %v1679 = vpop.f32.mrf.mxu0
      %1680 = vmatprep.mubr.bf16.mxu0 0
      %1681 = vmatmul.mubr.bf16.gmra.mxu0 %v1413
      %v1682 = vpop.f32.mrf.mxu0
      %v1683 = vadd.f32 %v1507, %v1682
      %v1684 = vpop.f32.mrf.mxu0
      %v1685 = vpop.f32.mrf.mxu0
      %v1686 = vadd.f32 %v1510, %v1685
      %v1687 = vpop.f32.mrf.mxu0
      %1688 = vmatprep.mubr.bf16.mxu0 0
      %1689 = vmatmul.mubr.bf16.gmra.mxu0 %v1416
      %v1690 = vpop.f32.mrf.mxu0
      %v1691 = vadd.f32 %v1515, %v1690
      %v1692 = vpop.f32.mrf.mxu0
      %v1693 = vpop.f32.mrf.mxu0
      %v1694 = vadd.f32 %v1518, %v1693
      %v1695 = vpop.f32.mrf.mxu0
      %1696 = vmatprep.mubr.bf16.mxu0 0
      %1697 = vmatmul.mubr.bf16.gmra.mxu0 %v1419
      %v1698 = vpop.f32.mrf.mxu0
      %v1699 = vadd.f32 %v1523, %v1698
      %v1700 = vpop.f32.mrf.mxu0
      %v1701 = vpop.f32.mrf.mxu0
      %v1702 = vadd.f32 %v1526, %v1701
      %v1703 = vpop.f32.mrf.mxu0
      %1704 = vmatprep.mubr.bf16.mxu0 0
      %1705 = vmatmul.mubr.bf16.gmra.mxu0 %v1422
      %v1706 = vpop.f32.mrf.mxu0
      %v1707 = vadd.f32 %v1531, %v1706
      %v1708 = vpop.f32.mrf.mxu0
      %v1709 = vpop.f32.mrf.mxu0
      %v1710 = vadd.f32 %v1534, %v1709
      %v1711 = vpop.f32.mrf.mxu0
      %1712 = vmatprep.mubr.bf16.mxu0 0
      %1713 = vmatmul.mubr.bf16.gmra.mxu0 %v1425
      %v1714 = vpop.f32.mrf.mxu0
      %v1715 = vadd.f32 %v1539, %v1714
      %v1716 = vpop.f32.mrf.mxu0
      %v1717 = vpop.f32.mrf.mxu0
      %v1718 = vadd.f32 %v1542, %v1717
      %v1719 = vpop.f32.mrf.mxu0
      %1720 = vmatprep.mubr.bf16.mxu0 0
      %1721 = vmatmul.mubr.bf16.gmra.mxu0 %v1428
      %v1722 = vpop.f32.mrf.mxu0
      %v1723 = vadd.f32 %v1547, %v1722
      %v1724 = vpop.f32.mrf.mxu0
      %v1725 = vpop.f32.mrf.mxu0
      %v1726 = vadd.f32 %v1550, %v1725
      %v1727 = vpop.f32.mrf.mxu0
      %1728 = vmatprep.mubr.bf16.mxu0 0
      %1729 = vmatmul.mubr.bf16.gmra.mxu0 %v1431
      %v1730 = vpop.f32.mrf.mxu0
      %v1731 = vadd.f32 %v1555, %v1730
      %v1732 = vpop.f32.mrf.mxu0
      %v1733 = vpop.f32.mrf.mxu0
      %v1734 = vadd.f32 %v1558, %v1733
      %v1735 = vpop.f32.mrf.mxu0
      %1736 = vmatprep.mubr.bf16.mxu0 0
      %1737 = vmatmul.mubr.bf16.gmra.mxu0 %v1434
      %v1738 = vpop.f32.mrf.mxu0
      %v1739 = vadd.f32 %v1563, %v1738
      %v1740 = vpop.f32.mrf.mxu0
      %v1741 = vpop.f32.mrf.mxu0
      %v1742 = vadd.f32 %v1566, %v1741
      %v1743 = vpop.f32.mrf.mxu0
      %1744 = vmatprep.mubr.bf16.mxu0 0
      %1745 = vmatmul.mubr.bf16.gmra.mxu0 %v1437
      %v1746 = vpop.f32.mrf.mxu0
      %v1747 = vadd.f32 %v1571, %v1746
      %v1748 = vpop.f32.mrf.mxu0
      %v1749 = vpop.f32.mrf.mxu0
      %v1750 = vadd.f32 %v1574, %v1749
      %v1751 = vpop.f32.mrf.mxu0
      %1752 = vmatprep.mubr.bf16.mxu0 0
      %1753 = vmatmul.mubr.bf16.gmra.mxu0 %v1440
      %v1754 = vpop.f32.mrf.mxu0
      %v1755 = vadd.f32 %v1579, %v1754
      %v1756 = vpop.f32.mrf.mxu0
      %v1757 = vpop.f32.mrf.mxu0
      %v1758 = vadd.f32 %v1582, %v1757
      %v1759 = vpop.f32.mrf.mxu0
      %1760 = vmatprep.mubr.bf16.mxu0 0
      %1761 = vmatmul.mubr.bf16.gmra.mxu0 %v1443
      %v1762 = vpop.f32.mrf.mxu0
      %v1763 = vadd.f32 %v1587, %v1762
      %v1764 = vpop.f32.mrf.mxu0
      %v1765 = vpop.f32.mrf.mxu0
      %v1766 = vadd.f32 %v1590, %v1765
      %v1767 = vpop.f32.mrf.mxu0
      %1768 = vmatprep.mubr.bf16.mxu0 0
      %1769 = vmatmul.mubr.bf16.gmra.mxu0 %v1446
      %v1770 = vpop.f32.mrf.mxu0
      %v1771 = vadd.f32 %v1595, %v1770
      %v1772 = vpop.f32.mrf.mxu0
      %v1773 = vpop.f32.mrf.mxu0
      %v1774 = vadd.f32 %v1598, %v1773
      %v1775 = vpop.f32.mrf.mxu0
      %1776 = vmatprep.mubr.bf16.mxu0 0
      %1777 = vmatmul.mubr.bf16.gmra.mxu0 %v1449
      %v1778 = vpop.f32.mrf.mxu0
      %v1779 = vadd.f32 %v1603, %v1778
      %v1780 = vpop.f32.mrf.mxu0
      %v1781 = vpop.f32.mrf.mxu0
      %v1782 = vadd.f32 %v1606, %v1781
      %v1783 = vpop.f32.mrf.mxu0
      %1784 = vmatprep.mubr.bf16.mxu0 0
      %1785 = vmatmul.mubr.bf16.gmra.mxu0 %v1452
      %v1786 = vpop.f32.mrf.mxu0
      %v1787 = vadd.f32 %v1611, %v1786
      %v1788 = vpop.f32.mrf.mxu0
      %v1789 = vpop.f32.mrf.mxu0
      %v1790 = vadd.f32 %v1614, %v1789
      %v1791 = vpop.f32.mrf.mxu0
      %1792 = vmatprep.mubr.bf16.mxu0 0
      %1793 = vmatmul.mubr.bf16.gmra.mxu0 %v1455
      %v1794 = vpop.f32.mrf.mxu0
      %v1795 = vadd.f32 %v1619, %v1794
      %v1796 = vpop.f32.mrf.mxu0
      %v1797 = vpop.f32.mrf.mxu0
      %v1798 = vadd.f32 %v1622, %v1797
      %v1799 = vpop.f32.mrf.mxu0
      %1800 = vdwg.mxu0
      %s1801 = scalar_lea.vmem %s3, 24
      %v1802 = vld [vmem:[%s1801] sm:$0xf]
      %v1803 = vld [vmem:[%s1801 + $0x4] sm:$0xf]
      %v1804 = vld [vmem:[%s1801 + $0x8] sm:$0xf]
      %v1808 = vunpack.c.l.b16 %v1802
      %v1809 = vunpack.c.l.b16 %v1803
      %v1810 = vunpack.c.l.b16 %v1804
      %v1811 = vpack.c.b16 %v1809, %v1808
      %v1812 = vpack.c.b16 %v1810, %v1810
      %v1815 = vsel %vm1460, %v1812, 0
      %1817 = vmatprep.subr.bf16.mxu0 0
      %1818 = vmatpush1.bf16.msra.mxu0 0
      %1819 = vmatprep.subr.bf16.mxu0 0
      %1820 = vmatpush1.bf16.msra.mxu0 0
      %1821 = vmatprep.subr.bf16.mxu0 0
      %1822 = vmatpush1.bf16.msra.mxu0 0
      %1823 = vmatprep.subr.bf16.mxu0 0
      %1824 = vmatpush1.bf16.msra.mxu0 0
      %1825 = vmatprep.subr.bf16.mxu0 0
      %1826 = vmatpush1.bf16.msra.mxu0 0
      %1827 = vmatprep.subr.bf16.mxu0 0
      %1828 = vmatpush1.bf16.msra.mxu0 0
      %1829 = vmatprep.subr.bf16.mxu0 0
      %1830 = vmatpush1.bf16.msra.mxu0 %v1815
      %1831 = vmatprep.subr.bf16.mxu0 0
      %1832 = vmatpush1.bf16.msra.mxu0 %v1811
      %1833 = vmatprep.subr.bf16.mxu0 0
      %1834 = vmatpush2.bf16.msra.mxu0 0
      %1835 = vmatprep.subr.bf16.mxu0 0
      %1836 = vmatpush2.bf16.msra.mxu0 0
      %1837 = vmatprep.subr.bf16.mxu0 0
      %1838 = vmatpush2.bf16.msra.mxu0 0
      %1839 = vmatprep.subr.bf16.mxu0 0
      %1840 = vmatpush2.bf16.msra.mxu0 0
      %1841 = vmatprep.subr.bf16.mxu0 0
      %1842 = vmatpush2.bf16.msra.mxu0 0
      %1843 = vmatprep.subr.bf16.mxu0 0
      %1844 = vmatpush2.bf16.msra.mxu0 0
      %1845 = vmatprep.subr.bf16.mxu0 0
      %1846 = vmatpush2.bf16.msra.mxu0 0
      %1847 = vmatprep.subr.bf16.mxu0 0
      %1848 = vmatpush2.bf16.msra.mxu0 0
      %1849 = vmatprep.mubr.bf16.mxu0 0
      %1850 = vmatmul.mubr.bf16.gmra.mxu0 %v1416
      %v1851 = vpop.f32.mrf.mxu0
      %v1852 = vadd.f32 0.0, %v1851
      %v1853 = vpop.f32.mrf.mxu0
      %v1854 = vpop.f32.mrf.mxu0
      %v1855 = vadd.f32 0.0, %v1854
      %v1856 = vpop.f32.mrf.mxu0
      %1857 = vmatprep.mubr.bf16.mxu0 0
      %1858 = vmatmul.mubr.bf16.gmra.mxu0 %v1419
      %v1859 = vpop.f32.mrf.mxu0
      %v1860 = vadd.f32 0.0, %v1859
      %v1861 = vpop.f32.mrf.mxu0
      %v1862 = vpop.f32.mrf.mxu0
      %v1863 = vadd.f32 0.0, %v1862
      %v1864 = vpop.f32.mrf.mxu0
      %1865 = vmatprep.mubr.bf16.mxu0 0
      %1866 = vmatmul.mubr.bf16.gmra.mxu0 %v1422
      %v1867 = vpop.f32.mrf.mxu0
      %v1868 = vadd.f32 0.0, %v1867
      %v1869 = vpop.f32.mrf.mxu0
      %v1870 = vpop.f32.mrf.mxu0
      %v1871 = vadd.f32 0.0, %v1870
      %v1872 = vpop.f32.mrf.mxu0
      %1873 = vmatprep.mubr.bf16.mxu0 0
      %1874 = vmatmul.mubr.bf16.gmra.mxu0 %v1425
      %v1875 = vpop.f32.mrf.mxu0
      %v1876 = vadd.f32 0.0, %v1875
      %v1877 = vpop.f32.mrf.mxu0
      %v1878 = vpop.f32.mrf.mxu0
      %v1879 = vadd.f32 0.0, %v1878
      %v1880 = vpop.f32.mrf.mxu0
      %1881 = vmatprep.mubr.bf16.mxu0 0
      %1882 = vmatmul.mubr.bf16.gmra.mxu0 %v1428
      %v1883 = vpop.f32.mrf.mxu0
      %v1884 = vadd.f32 0.0, %v1883
      %v1885 = vpop.f32.mrf.mxu0
      %v1886 = vpop.f32.mrf.mxu0
      %v1887 = vadd.f32 0.0, %v1886
      %v1888 = vpop.f32.mrf.mxu0
      %1889 = vmatprep.mubr.bf16.mxu0 0
      %1890 = vmatmul.mubr.bf16.gmra.mxu0 %v1431
      %v1891 = vpop.f32.mrf.mxu0
      %v1892 = vadd.f32 0.0, %v1891
      %v1893 = vpop.f32.mrf.mxu0
      %v1894 = vpop.f32.mrf.mxu0
      %v1895 = vadd.f32 0.0, %v1894
      %v1896 = vpop.f32.mrf.mxu0
      %1897 = vmatprep.mubr.bf16.mxu0 0
      %1898 = vmatmul.mubr.bf16.gmra.mxu0 %v1434
      %v1899 = vpop.f32.mrf.mxu0
      %v1900 = vadd.f32 0.0, %v1899
      %v1901 = vpop.f32.mrf.mxu0
      %v1902 = vpop.f32.mrf.mxu0
      %v1903 = vadd.f32 0.0, %v1902
      %v1904 = vpop.f32.mrf.mxu0
      %1905 = vmatprep.mubr.bf16.mxu0 0
      %1906 = vmatmul.mubr.bf16.gmra.mxu0 %v1437
      %v1907 = vpop.f32.mrf.mxu0
      %v1908 = vadd.f32 0.0, %v1907
      %v1909 = vpop.f32.mrf.mxu0
      %v1910 = vpop.f32.mrf.mxu0
      %v1911 = vadd.f32 0.0, %v1910
      %v1912 = vpop.f32.mrf.mxu0
      %1913 = vmatprep.mubr.bf16.mxu0 0
      %1914 = vmatmul.mubr.bf16.gmra.mxu0 %v1440
      %v1915 = vpop.f32.mrf.mxu0
      %v1916 = vadd.f32 0.0, %v1915
      %v1917 = vpop.f32.mrf.mxu0
      %v1918 = vpop.f32.mrf.mxu0
      %v1919 = vadd.f32 0.0, %v1918
      %v1920 = vpop.f32.mrf.mxu0
      %1921 = vmatprep.mubr.bf16.mxu0 0
      %1922 = vmatmul.mubr.bf16.gmra.mxu0 %v1443
      %v1923 = vpop.f32.mrf.mxu0
      %v1924 = vadd.f32 0.0, %v1923
      %v1925 = vpop.f32.mrf.mxu0
      %v1926 = vpop.f32.mrf.mxu0
      %v1927 = vadd.f32 0.0, %v1926
      %v1928 = vpop.f32.mrf.mxu0
      %1929 = vmatprep.mubr.bf16.mxu0 0
      %1930 = vmatmul.mubr.bf16.gmra.mxu0 %v1446
      %v1931 = vpop.f32.mrf.mxu0
      %v1932 = vadd.f32 0.0, %v1931
      %v1933 = vpop.f32.mrf.mxu0
      %v1934 = vpop.f32.mrf.mxu0
      %v1935 = vadd.f32 0.0, %v1934
      %v1936 = vpop.f32.mrf.mxu0
      %1937 = vmatprep.mubr.bf16.mxu0 0
      %1938 = vmatmul.mubr.bf16.gmra.mxu0 %v1449
      %v1939 = vpop.f32.mrf.mxu0
      %v1940 = vadd.f32 0.0, %v1939
      %v1941 = vpop.f32.mrf.mxu0
      %v1942 = vpop.f32.mrf.mxu0
      %v1943 = vadd.f32 0.0, %v1942
      %v1944 = vpop.f32.mrf.mxu0
      %1945 = vmatprep.mubr.bf16.mxu0 0
      %1946 = vmatmul.mubr.bf16.gmra.mxu0 %v1452
      %v1947 = vpop.f32.mrf.mxu0
      %v1948 = vadd.f32 0.0, %v1947
      %v1949 = vpop.f32.mrf.mxu0
      %v1950 = vpop.f32.mrf.mxu0
      %v1951 = vadd.f32 0.0, %v1950
      %v1952 = vpop.f32.mrf.mxu0
      %1953 = vmatprep.mubr.bf16.mxu0 0
      %1954 = vmatmul.mubr.bf16.gmra.mxu0 %v1455
      %v1955 = vpop.f32.mrf.mxu0
      %v1956 = vadd.f32 0.0, %v1955
      %v1957 = vpop.f32.mrf.mxu0
      %v1958 = vpop.f32.mrf.mxu0
      %v1959 = vadd.f32 0.0, %v1958
      %v1960 = vpop.f32.mrf.mxu0
      %1961 = vmatprep.mubr.bf16.mxu0 0
      %1962 = vmatmul.mubr.bf16.gmra.mxu0 %v1458
      %v1963 = vpop.f32.mrf.mxu0
      %v1964 = vadd.f32 0.0, %v1963
      %v1965 = vpop.f32.mrf.mxu0
      %v1966 = vpop.f32.mrf.mxu0
      %v1967 = vadd.f32 0.0, %v1966
      %v1968 = vpop.f32.mrf.mxu0
      %1969 = vmatprep.mubr.bf16.mxu0 0
      %1970 = vmatmul.mubr.bf16.gmra.mxu0 %v1635
      %v1971 = vpop.f32.mrf.mxu0
      %v1972 = vadd.f32 0.0, %v1971
      %v1973 = vpop.f32.mrf.mxu0
      %v1974 = vpop.f32.mrf.mxu0
      %v1975 = vadd.f32 0.0, %v1974
      %v1976 = vpop.f32.mrf.mxu0
      %1977 = vdwg.mxu0
      %v1978 = vadd.f32 %v1675, %v1852
      %v1979 = vadd.f32 %v1678, %v1855
      %v1980 = vadd.f32 %v1683, %v1860
      %v1981 = vadd.f32 %v1686, %v1863
      %v1982 = vadd.f32 %v1691, %v1868
      %v1983 = vadd.f32 %v1694, %v1871
      %v1984 = vadd.f32 %v1699, %v1876
      %v1985 = vadd.f32 %v1702, %v1879
      %v1986 = vadd.f32 %v1707, %v1884
      %v1987 = vadd.f32 %v1710, %v1887
      %v1988 = vadd.f32 %v1715, %v1892
      %v1989 = vadd.f32 %v1718, %v1895
      %v1990 = vadd.f32 %v1723, %v1900
      %v1991 = vadd.f32 %v1726, %v1903
      %v1992 = vadd.f32 %v1731, %v1908
      %v1993 = vadd.f32 %v1734, %v1911
      %v1994 = vadd.f32 %v1739, %v1916
      %v1995 = vadd.f32 %v1742, %v1919
      %v1996 = vadd.f32 %v1747, %v1924
      %v1997 = vadd.f32 %v1750, %v1927
      %v1998 = vadd.f32 %v1755, %v1932
      %v1999 = vadd.f32 %v1758, %v1935
      %v2000 = vadd.f32 %v1763, %v1940
      %v2001 = vadd.f32 %v1766, %v1943
      %v2002 = vadd.f32 %v1771, %v1948
      %v2003 = vadd.f32 %v1774, %v1951
      %v2004 = vadd.f32 %v1779, %v1956
      %v2005 = vadd.f32 %v1782, %v1959
      %v2006 = vadd.f32 %v1787, %v1964
      %v2007 = vadd.f32 %v1790, %v1967
      %v2008 = vadd.f32 %v1795, %v1972
      %v2009 = vadd.f32 %v1798, %v1975
      %v2010 = vld [vmem:[%s4] sm:$0x1]
      %v2012 = vlaneseq
      %v2013 = vshrl.u32 %v2012, 7
      %v2014 = vsub.s32 0, %v2013
      %v2015 = vrot.slane %v2010, %v2014
      %v2017 = vadd.f32 %v1978, %v2015
      %v2018 = vadd.f32 %v1979, %v2015
      %v2019 = vadd.f32 %v1980, %v2015
      %v2020 = vadd.f32 %v1981, %v2015
      %v2021 = vadd.f32 %v1982, %v2015
      %v2022 = vadd.f32 %v1983, %v2015
      %v2023 = vadd.f32 %v1984, %v2015
      %v2024 = vadd.f32 %v1985, %v2015
      %v2025 = vadd.f32 %v1986, %v2015
      %v2026 = vadd.f32 %v1987, %v2015
      %v2027 = vadd.f32 %v1988, %v2015
      %v2028 = vadd.f32 %v1989, %v2015
      %v2029 = vadd.f32 %v1990, %v2015
      %v2030 = vadd.f32 %v1991, %v2015
      %v2031 = vadd.f32 %v1992, %v2015
      %v2032 = vadd.f32 %v1993, %v2015
      %v2033 = vadd.f32 %v1994, %v2015
      %v2034 = vadd.f32 %v1995, %v2015
      %v2035 = vadd.f32 %v1996, %v2015
      %v2036 = vadd.f32 %v1997, %v2015
      %v2037 = vadd.f32 %v1998, %v2015
      %v2038 = vadd.f32 %v1999, %v2015
      %v2039 = vadd.f32 %v2000, %v2015
      %v2040 = vadd.f32 %v2001, %v2015
      %v2041 = vadd.f32 %v2002, %v2015
      %v2042 = vadd.f32 %v2003, %v2015
      %v2043 = vadd.f32 %v2004, %v2015
      %v2044 = vadd.f32 %v2005, %v2015
      %v2045 = vadd.f32 %v2006, %v2015
      %v2046 = vadd.f32 %v2007, %v2015
      %v2047 = vadd.f32 %v2008, %v2015
      %v2048 = vadd.f32 %v2009, %v2015
      %v2049 = vld [vmem:[%s355] sm:$0xf]
      %v2050 = vld [vmem:[%s355 + $0x4] sm:$0xf]
      %v2051 = vld [vmem:[%s355 + $0x8] sm:$0xf]
      %v2052 = vld [vmem:[%s355 + $0xc] sm:$0xf]
      %v2053 = vld [vmem:[%s355 + $0x10] sm:$0xf]
      %v2054 = vld [vmem:[%s355 + $0x14] sm:$0xf]
      %v2055 = vld [vmem:[%s355 + $0x18] sm:$0xf]
      %v2056 = vld [vmem:[%s355 + $0x1c] sm:$0xf]
      %v2057 = vld [vmem:[%s355 + $0x20] sm:$0xf]
      %v2058 = vld [vmem:[%s355 + $0x24] sm:$0xf]
      %v2059 = vld [vmem:[%s355 + $0x28] sm:$0xf]
      %v2060 = vld [vmem:[%s355 + $0x2c] sm:$0xf]
      %v2061 = vld [vmem:[%s355 + $0x30] sm:$0xf]
      %v2062 = vld [vmem:[%s355 + $0x34] sm:$0xf]
      %v2063 = vld [vmem:[%s355 + $0x38] sm:$0xf]
      %v2064 = vld [vmem:[%s355 + $0x3c] sm:$0xf]
      %v2065 = vld [vmem:[%s355 + $0x40] sm:$0xf]
      %v2066 = vld [vmem:[%s355 + $0x44] sm:$0xf]
      %v2067 = vld [vmem:[%s355 + $0x48] sm:$0xf]
      %v2068 = vld [vmem:[%s355 + $0x4c] sm:$0xf]
      %v2069 = vld [vmem:[%s355 + $0x50] sm:$0xf]
      %v2070 = vld [vmem:[%s355 + $0x54] sm:$0xf]
      %v2071 = vld [vmem:[%s355 + $0x58] sm:$0xf]
      %v2072 = vld [vmem:[%s355 + $0x5c] sm:$0xf]
      %v2073 = vld [vmem:[%s355 + $0x60] sm:$0xf]
      %v2074 = vld [vmem:[%s355 + $0x64] sm:$0xf]
      %v2075 = vld [vmem:[%s355 + $0x68] sm:$0xf]
      %v2076 = vld [vmem:[%s355 + $0x6c] sm:$0xf]
      %v2077 = vld [vmem:[%s355 + $0x70] sm:$0xf]
      %v2078 = vld [vmem:[%s355 + $0x74] sm:$0xf]
      %v2079 = vld [vmem:[%s355 + $0x78] sm:$0xf]
      %v2080 = vld [vmem:[%s355 + $0x7c] sm:$0xf]
      %v2081 = vld [vmem:[%s6] sm:$0x3]
      %v2082 = vld [vmem:[%s7] sm:$0x1]
      %v2084 = vlaneseq
      %v2085 = vshrl.u32 %v2084, 7
      %v2086 = vsub.s32 0, %v2085
      %v2087 = vrot.slane %v2082, %v2086
      %v2121 = vunpack.c.l.b16 %v2049
      %v2122 = vunpack.c.l.b16 %v2050
      %v2123 = vunpack.c.l.b16 %v2051
      %v2124 = vunpack.c.l.b16 %v2052
      %v2125 = vunpack.c.l.b16 %v2053
      %v2126 = vunpack.c.l.b16 %v2054
      %v2127 = vunpack.c.l.b16 %v2055
      %v2128 = vunpack.c.l.b16 %v2056
      %v2129 = vunpack.c.l.b16 %v2057
      %v2130 = vunpack.c.l.b16 %v2058
      %v2131 = vunpack.c.l.b16 %v2059
      %v2132 = vunpack.c.l.b16 %v2060
      %v2133 = vunpack.c.l.b16 %v2061
      %v2134 = vunpack.c.l.b16 %v2062
      %v2135 = vunpack.c.l.b16 %v2063
      %v2136 = vunpack.c.l.b16 %v2064
      %v2137 = vunpack.c.l.b16 %v2065
      %v2138 = vunpack.c.l.b16 %v2066
      %v2139 = vunpack.c.l.b16 %v2067
      %v2140 = vunpack.c.l.b16 %v2068
      %v2141 = vunpack.c.l.b16 %v2069
      %v2142 = vunpack.c.l.b16 %v2070
      %v2143 = vunpack.c.l.b16 %v2071
      %v2144 = vunpack.c.l.b16 %v2072
      %v2145 = vunpack.c.l.b16 %v2073
      %v2146 = vunpack.c.l.b16 %v2074
      %v2147 = vunpack.c.l.b16 %v2075
      %v2148 = vunpack.c.l.b16 %v2076
      %v2149 = vunpack.c.l.b16 %v2077
      %v2150 = vunpack.c.l.b16 %v2078
      %v2151 = vunpack.c.l.b16 %v2079
      %v2152 = vunpack.c.l.b16 %v2080
      %v2153 = vpack.c.b16 %v2122, %v2121
      %v2154 = vpack.c.b16 %v2124, %v2123
      %v2155 = vpack.c.b16 %v2126, %v2125
      %v2156 = vpack.c.b16 %v2128, %v2127
      %v2157 = vpack.c.b16 %v2130, %v2129
      %v2158 = vpack.c.b16 %v2132, %v2131
      %v2159 = vpack.c.b16 %v2134, %v2133
      %v2160 = vpack.c.b16 %v2136, %v2135
      %v2161 = vpack.c.b16 %v2138, %v2137
      %v2162 = vpack.c.b16 %v2140, %v2139
      %v2163 = vpack.c.b16 %v2142, %v2141
      %v2164 = vpack.c.b16 %v2144, %v2143
      %v2165 = vpack.c.b16 %v2146, %v2145
      %v2166 = vpack.c.b16 %v2148, %v2147
      %v2167 = vpack.c.b16 %v2150, %v2149
      %v2168 = vpack.c.b16 %v2152, %v2151
      %vm2169 = vcmask 31744
      %v2171 = vsel %vm2169, %v2153, 0
      %v2174 = vsel %vm2169, %v2154, 0
      %v2177 = vsel %vm2169, %v2155, 0
      %v2180 = vsel %vm2169, %v2156, 0
      %v2183 = vsel %vm2169, %v2157, 0
      %v2186 = vsel %vm2169, %v2158, 0
      %v2189 = vsel %vm2169, %v2159, 0
      %v2192 = vsel %vm2169, %v2160, 0
      %v2195 = vsel %vm2169, %v2161, 0
      %v2198 = vsel %vm2169, %v2162, 0
      %v2201 = vsel %vm2169, %v2163, 0
      %v2204 = vsel %vm2169, %v2164, 0
      %v2207 = vsel %vm2169, %v2165, 0
      %v2210 = vsel %vm2169, %v2166, 0
      %v2213 = vsel %vm2169, %v2167, 0
      %v2216 = vsel %vm2169, %v2168, 0
      %v2219 = vsel %vm555, %v2081, 0
      %2221 = vmatprep.subr.bf16.mxu0 0
      %2222 = vmatpush1.bf16.msra.mxu0 0
      %2223 = vmatprep.subr.bf16.mxu0 0
      %2224 = vmatpush1.bf16.msra.mxu0 0
      %2225 = vmatprep.subr.bf16.mxu0 0
      %2226 = vmatpush1.bf16.msra.mxu0 0
      %2227 = vmatprep.subr.bf16.mxu0 0
      %2228 = vmatpush1.bf16.msra.mxu0 0
      %2229 = vmatprep.subr.bf16.mxu0 0
      %2230 = vmatpush1.bf16.msra.mxu0 0
      %2231 = vmatprep.subr.bf16.mxu0 0
      %2232 = vmatpush1.bf16.msra.mxu0 0
      %2233 = vmatprep.subr.bf16.mxu0 0
      %2234 = vmatpush1.bf16.msra.mxu0 0
      %2235 = vmatprep.subr.bf16.mxu0 0
      %2236 = vmatpush1.bf16.msra.mxu0 %v2219
      %2237 = vmatprep.subr.bf16.mxu0 0
      %2238 = vmatpush2.bf16.msra.mxu0 0
      %2239 = vmatprep.subr.bf16.mxu0 0
      %2240 = vmatpush2.bf16.msra.mxu0 0
      %2241 = vmatprep.subr.bf16.mxu0 0
      %2242 = vmatpush2.bf16.msra.mxu0 0
      %2243 = vmatprep.subr.bf16.mxu0 0
      %2244 = vmatpush2.bf16.msra.mxu0 0
      %2245 = vmatprep.subr.bf16.mxu0 0
      %2246 = vmatpush2.bf16.msra.mxu0 0
      %2247 = vmatprep.subr.bf16.mxu0 0
      %2248 = vmatpush2.bf16.msra.mxu0 0
      %2249 = vmatprep.subr.bf16.mxu0 0
      %2250 = vmatpush2.bf16.msra.mxu0 0
      %2251 = vmatprep.subr.bf16.mxu0 0
      %2252 = vmatpush2.bf16.msra.mxu0 0
      %2253 = vmatprep.mubr.bf16.mxu0 0
      %2254 = vmatmul.mubr.bf16.gmra.mxu0 %v2171
      %v2255 = vpop.f32.mrf.mxu0
      %v2256 = vadd.f32 %v2087, %v2255
      %v2257 = vpop.f32.mrf.mxu0
      %v2258 = vpop.f32.mrf.mxu0
      %v2259 = vadd.f32 %v2087, %v2258
      %v2260 = vpop.f32.mrf.mxu0
      %2261 = vmatprep.mubr.bf16.mxu0 0
      %2262 = vmatmul.mubr.bf16.gmra.mxu0 %v2174
      %v2263 = vpop.f32.mrf.mxu0
      %v2264 = vadd.f32 %v2087, %v2263
      %v2265 = vpop.f32.mrf.mxu0
      %v2266 = vpop.f32.mrf.mxu0
      %v2267 = vadd.f32 %v2087, %v2266
      %v2268 = vpop.f32.mrf.mxu0
      %2269 = vmatprep.mubr.bf16.mxu0 0
      %2270 = vmatmul.mubr.bf16.gmra.mxu0 %v2177
      %v2271 = vpop.f32.mrf.mxu0
      %v2272 = vadd.f32 %v2087, %v2271
      %v2273 = vpop.f32.mrf.mxu0
      %v2274 = vpop.f32.mrf.mxu0
      %v2275 = vadd.f32 %v2087, %v2274
      %v2276 = vpop.f32.mrf.mxu0
      %2277 = vmatprep.mubr.bf16.mxu0 0
      %2278 = vmatmul.mubr.bf16.gmra.mxu0 %v2180
      %v2279 = vpop.f32.mrf.mxu0
      %v2280 = vadd.f32 %v2087, %v2279
      %v2281 = vpop.f32.mrf.mxu0
      %v2282 = vpop.f32.mrf.mxu0
      %v2283 = vadd.f32 %v2087, %v2282
      %v2284 = vpop.f32.mrf.mxu0
      %2285 = vmatprep.mubr.bf16.mxu0 0
      %2286 = vmatmul.mubr.bf16.gmra.mxu0 %v2183
      %v2287 = vpop.f32.mrf.mxu0
      %v2288 = vadd.f32 %v2087, %v2287
      %v2289 = vpop.f32.mrf.mxu0
      %v2290 = vpop.f32.mrf.mxu0
      %v2291 = vadd.f32 %v2087, %v2290
      %v2292 = vpop.f32.mrf.mxu0
      %2293 = vmatprep.mubr.bf16.mxu0 0
      %2294 = vmatmul.mubr.bf16.gmra.mxu0 %v2186
      %v2295 = vpop.f32.mrf.mxu0
      %v2296 = vadd.f32 %v2087, %v2295
      %v2297 = vpop.f32.mrf.mxu0
      %v2298 = vpop.f32.mrf.mxu0
      %v2299 = vadd.f32 %v2087, %v2298
      %v2300 = vpop.f32.mrf.mxu0
      %2301 = vmatprep.mubr.bf16.mxu0 0
      %2302 = vmatmul.mubr.bf16.gmra.mxu0 %v2189
      %v2303 = vpop.f32.mrf.mxu0
      %v2304 = vadd.f32 %v2087, %v2303
      %v2305 = vpop.f32.mrf.mxu0
      %v2306 = vpop.f32.mrf.mxu0
      %v2307 = vadd.f32 %v2087, %v2306
      %v2308 = vpop.f32.mrf.mxu0
      %2309 = vmatprep.mubr.bf16.mxu0 0
      %2310 = vmatmul.mubr.bf16.gmra.mxu0 %v2192
      %v2311 = vpop.f32.mrf.mxu0
      %v2312 = vadd.f32 %v2087, %v2311
      %v2313 = vpop.f32.mrf.mxu0
      %v2314 = vpop.f32.mrf.mxu0
      %v2315 = vadd.f32 %v2087, %v2314
      %v2316 = vpop.f32.mrf.mxu0
      %2317 = vmatprep.mubr.bf16.mxu0 0
      %2318 = vmatmul.mubr.bf16.gmra.mxu0 %v2195
      %v2319 = vpop.f32.mrf.mxu0
      %v2320 = vadd.f32 %v2087, %v2319
      %v2321 = vpop.f32.mrf.mxu0
      %v2322 = vpop.f32.mrf.mxu0
      %v2323 = vadd.f32 %v2087, %v2322
      %v2324 = vpop.f32.mrf.mxu0
      %2325 = vmatprep.mubr.bf16.mxu0 0
      %2326 = vmatmul.mubr.bf16.gmra.mxu0 %v2198
      %v2327 = vpop.f32.mrf.mxu0
      %v2328 = vadd.f32 %v2087, %v2327
      %v2329 = vpop.f32.mrf.mxu0
      %v2330 = vpop.f32.mrf.mxu0
      %v2331 = vadd.f32 %v2087, %v2330
      %v2332 = vpop.f32.mrf.mxu0
      %2333 = vmatprep.mubr.bf16.mxu0 0
      %2334 = vmatmul.mubr.bf16.gmra.mxu0 %v2201
      %v2335 = vpop.f32.mrf.mxu0
      %v2336 = vadd.f32 %v2087, %v2335
      %v2337 = vpop.f32.mrf.mxu0
      %v2338 = vpop.f32.mrf.mxu0
      %v2339 = vadd.f32 %v2087, %v2338
      %v2340 = vpop.f32.mrf.mxu0
      %2341 = vmatprep.mubr.bf16.mxu0 0
      %2342 = vmatmul.mubr.bf16.gmra.mxu0 %v2204
      %v2343 = vpop.f32.mrf.mxu0
      %v2344 = vadd.f32 %v2087, %v2343
      %v2345 = vpop.f32.mrf.mxu0
      %v2346 = vpop.f32.mrf.mxu0
      %v2347 = vadd.f32 %v2087, %v2346
      %v2348 = vpop.f32.mrf.mxu0
      %2349 = vmatprep.mubr.bf16.mxu0 0
      %2350 = vmatmul.mubr.bf16.gmra.mxu0 %v2207
      %v2351 = vpop.f32.mrf.mxu0
      %v2352 = vadd.f32 %v2087, %v2351
      %v2353 = vpop.f32.mrf.mxu0
      %v2354 = vpop.f32.mrf.mxu0
      %v2355 = vadd.f32 %v2087, %v2354
      %v2356 = vpop.f32.mrf.mxu0
      %2357 = vmatprep.mubr.bf16.mxu0 0
      %2358 = vmatmul.mubr.bf16.gmra.mxu0 %v2210
      %v2359 = vpop.f32.mrf.mxu0
      %v2360 = vadd.f32 %v2087, %v2359
      %v2361 = vpop.f32.mrf.mxu0
      %v2362 = vpop.f32.mrf.mxu0
      %v2363 = vadd.f32 %v2087, %v2362
      %v2364 = vpop.f32.mrf.mxu0
      %2365 = vmatprep.mubr.bf16.mxu0 0
      %2366 = vmatmul.mubr.bf16.gmra.mxu0 %v2213
      %v2367 = vpop.f32.mrf.mxu0
      %v2368 = vadd.f32 %v2087, %v2367
      %v2369 = vpop.f32.mrf.mxu0
      %v2370 = vpop.f32.mrf.mxu0
      %v2371 = vadd.f32 %v2087, %v2370
      %v2372 = vpop.f32.mrf.mxu0
      %2373 = vmatprep.mubr.bf16.mxu0 0
      %2374 = vmatmul.mubr.bf16.gmra.mxu0 %v2216
      %v2375 = vpop.f32.mrf.mxu0
      %v2376 = vadd.f32 %v2087, %v2375
      %v2377 = vpop.f32.mrf.mxu0
      %v2378 = vpop.f32.mrf.mxu0
      %v2379 = vadd.f32 %v2087, %v2378
      %v2380 = vpop.f32.mrf.mxu0
      %2381 = vdwg.mxu0
      %v2382 = vadd.f32 %v2017, %v2256
      %v2383 = vadd.f32 %v2018, %v2259
      %v2384 = vadd.f32 %v2019, %v2264
      %v2385 = vadd.f32 %v2020, %v2267
      %v2386 = vadd.f32 %v2021, %v2272
      %v2387 = vadd.f32 %v2022, %v2275
      %v2388 = vadd.f32 %v2023, %v2280
      %v2389 = vadd.f32 %v2024, %v2283
      %v2390 = vadd.f32 %v2025, %v2288
      %v2391 = vadd.f32 %v2026, %v2291
      %v2392 = vadd.f32 %v2027, %v2296
      %v2393 = vadd.f32 %v2028, %v2299
      %v2394 = vadd.f32 %v2029, %v2304
      %v2395 = vadd.f32 %v2030, %v2307
      %v2396 = vadd.f32 %v2031, %v2312
      %v2397 = vadd.f32 %v2032, %v2315
      %v2398 = vadd.f32 %v2033, %v2320
      %v2399 = vadd.f32 %v2034, %v2323
      %v2400 = vadd.f32 %v2035, %v2328
      %v2401 = vadd.f32 %v2036, %v2331
      %v2402 = vadd.f32 %v2037, %v2336
      %v2403 = vadd.f32 %v2038, %v2339
      %v2404 = vadd.f32 %v2039, %v2344
      %v2405 = vadd.f32 %v2040, %v2347
      %v2406 = vadd.f32 %v2041, %v2352
      %v2407 = vadd.f32 %v2042, %v2355
      %v2408 = vadd.f32 %v2043, %v2360
      %v2409 = vadd.f32 %v2044, %v2363
      %v2410 = vadd.f32 %v2045, %v2368
      %v2411 = vadd.f32 %v2046, %v2371
      %v2412 = vadd.f32 %v2047, %v2376
      %v2413 = vadd.f32 %v2048, %v2379
      %v2414 = vmax.f32 %v2382, 0.0
      %v2415 = vmax.f32 %v2383, 0.0
      %v2416 = vmax.f32 %v2384, 0.0
      %v2417 = vmax.f32 %v2385, 0.0
      %v2418 = vmax.f32 %v2386, 0.0
      %v2419 = vmax.f32 %v2387, 0.0
      %v2420 = vmax.f32 %v2388, 0.0
      %v2421 = vmax.f32 %v2389, 0.0
      %v2422 = vmax.f32 %v2390, 0.0
      %v2423 = vmax.f32 %v2391, 0.0
      %v2424 = vmax.f32 %v2392, 0.0
      %v2425 = vmax.f32 %v2393, 0.0
      %v2426 = vmax.f32 %v2394, 0.0
      %v2427 = vmax.f32 %v2395, 0.0
      %v2428 = vmax.f32 %v2396, 0.0
      %v2429 = vmax.f32 %v2397, 0.0
      %v2430 = vmax.f32 %v2398, 0.0
      %v2431 = vmax.f32 %v2399, 0.0
      %v2432 = vmax.f32 %v2400, 0.0
      %v2433 = vmax.f32 %v2401, 0.0
      %v2434 = vmax.f32 %v2402, 0.0
      %v2435 = vmax.f32 %v2403, 0.0
      %v2436 = vmax.f32 %v2404, 0.0
      %v2437 = vmax.f32 %v2405, 0.0
      %v2438 = vmax.f32 %v2406, 0.0
      %v2439 = vmax.f32 %v2407, 0.0
      %v2440 = vmax.f32 %v2408, 0.0
      %v2441 = vmax.f32 %v2409, 0.0
      %v2442 = vmax.f32 %v2410, 0.0
      %v2443 = vmax.f32 %v2411, 0.0
      %v2444 = vmax.f32 %v2412, 0.0
      %v2445 = vmax.f32 %v2413, 0.0
      %2446 = vst.msk [vmem:[%s360] sm:$0xff] %vm1286, %v2414
      %2447 = vst.msk [vmem:[%s360 + $0x8] sm:$0xff] %vm1286, %v2415
      %2448 = vst.msk [vmem:[%s360 + $0x10] sm:$0xff] %vm1286, %v2416
      %2449 = vst.msk [vmem:[%s360 + $0x18] sm:$0xff] %vm1286, %v2417
      %2450 = vst.msk [vmem:[%s360 + $0x20] sm:$0xff] %vm1286, %v2418
      %2451 = vst.msk [vmem:[%s360 + $0x28] sm:$0xff] %vm1286, %v2419
      %2452 = vst.msk [vmem:[%s360 + $0x30] sm:$0xff] %vm1286, %v2420
      %2453 = vst.msk [vmem:[%s360 + $0x38] sm:$0xff] %vm1286, %v2421
      %2454 = vst.msk [vmem:[%s360 + $0x40] sm:$0xff] %vm1286, %v2422
      %2455 = vst.msk [vmem:[%s360 + $0x48] sm:$0xff] %vm1286, %v2423
      %2456 = vst.msk [vmem:[%s360 + $0x50] sm:$0xff] %vm1286, %v2424
      %2457 = vst.msk [vmem:[%s360 + $0x58] sm:$0xff] %vm1286, %v2425
      %2458 = vst.msk [vmem:[%s360 + $0x60] sm:$0xff] %vm1286, %v2426
      %2459 = vst.msk [vmem:[%s360 + $0x68] sm:$0xff] %vm1286, %v2427
      %2460 = vst.msk [vmem:[%s360 + $0x70] sm:$0xff] %vm1286, %v2428
      %2461 = vst.msk [vmem:[%s360 + $0x78] sm:$0xff] %vm1286, %v2429
      %2462 = vst.msk [vmem:[%s360 + $0x80] sm:$0xff] %vm1286, %v2430
      %2463 = vst.msk [vmem:[%s360 + $0x88] sm:$0xff] %vm1286, %v2431
      %2464 = vst.msk [vmem:[%s360 + $0x90] sm:$0xff] %vm1286, %v2432
      %2465 = vst.msk [vmem:[%s360 + $0x98] sm:$0xff] %vm1286, %v2433
      %2466 = vst.msk [vmem:[%s360 + $0xa0] sm:$0xff] %vm1286, %v2434
      %2467 = vst.msk [vmem:[%s360 + $0xa8] sm:$0xff] %vm1286, %v2435
      %2468 = vst.msk [vmem:[%s360 + $0xb0] sm:$0xff] %vm1286, %v2436
      %2469 = vst.msk [vmem:[%s360 + $0xb8] sm:$0xff] %vm1286, %v2437
      %2470 = vst.msk [vmem:[%s360 + $0xc0] sm:$0xff] %vm1286, %v2438
      %2471 = vst.msk [vmem:[%s360 + $0xc8] sm:$0xff] %vm1286, %v2439
      %2472 = vst.msk [vmem:[%s360 + $0xd0] sm:$0xff] %vm1286, %v2440
      %2473 = vst.msk [vmem:[%s360 + $0xd8] sm:$0xff] %vm1286, %v2441
      %2474 = vst.msk [vmem:[%s360 + $0xe0] sm:$0xff] %vm1286, %v2442
      %2475 = vst.msk [vmem:[%s360 + $0xe8] sm:$0xff] %vm1286, %v2443
      %2476 = vst.msk [vmem:[%s360 + $0xf0] sm:$0xff] %vm1286, %v2444
      %2477 = vst.msk [vmem:[%s360 + $0xf8] sm:$0xff] %vm1286, %v2445
      %2478 = vst.msk [vmem:[%s365] sm:$0xff] %vm1286, %v2382
      %2479 = vst.msk [vmem:[%s365 + $0x8] sm:$0xff] %vm1286, %v2383
      %2480 = vst.msk [vmem:[%s365 + $0x10] sm:$0xff] %vm1286, %v2384
      %2481 = vst.msk [vmem:[%s365 + $0x18] sm:$0xff] %vm1286, %v2385
      %2482 = vst.msk [vmem:[%s365 + $0x20] sm:$0xff] %vm1286, %v2386
      %2483 = vst.msk [vmem:[%s365 + $0x28] sm:$0xff] %vm1286, %v2387
      %2484 = vst.msk [vmem:[%s365 + $0x30] sm:$0xff] %vm1286, %v2388
      %2485 = vst.msk [vmem:[%s365 + $0x38] sm:$0xff] %vm1286, %v2389
      %2486 = vst.msk [vmem:[%s365 + $0x40] sm:$0xff] %vm1286, %v2390
      %2487 = vst.msk [vmem:[%s365 + $0x48] sm:$0xff] %vm1286, %v2391
      %2488 = vst.msk [vmem:[%s365 + $0x50] sm:$0xff] %vm1286, %v2392
      %2489 = vst.msk [vmem:[%s365 + $0x58] sm:$0xff] %vm1286, %v2393
      %2490 = vst.msk [vmem:[%s365 + $0x60] sm:$0xff] %vm1286, %v2394
      %2491 = vst.msk [vmem:[%s365 + $0x68] sm:$0xff] %vm1286, %v2395
      %2492 = vst.msk [vmem:[%s365 + $0x70] sm:$0xff] %vm1286, %v2396
      %2493 = vst.msk [vmem:[%s365 + $0x78] sm:$0xff] %vm1286, %v2397
      %2494 = vst.msk [vmem:[%s365 + $0x80] sm:$0xff] %vm1286, %v2398
      %2495 = vst.msk [vmem:[%s365 + $0x88] sm:$0xff] %vm1286, %v2399
      %2496 = vst.msk [vmem:[%s365 + $0x90] sm:$0xff] %vm1286, %v2400
      %2497 = vst.msk [vmem:[%s365 + $0x98] sm:$0xff] %vm1286, %v2401
      %2498 = vst.msk [vmem:[%s365 + $0xa0] sm:$0xff] %vm1286, %v2402
      %2499 = vst.msk [vmem:[%s365 + $0xa8] sm:$0xff] %vm1286, %v2403
      %2500 = vst.msk [vmem:[%s365 + $0xb0] sm:$0xff] %vm1286, %v2404
      %2501 = vst.msk [vmem:[%s365 + $0xb8] sm:$0xff] %vm1286, %v2405
      %2502 = vst.msk [vmem:[%s365 + $0xc0] sm:$0xff] %vm1286, %v2406
      %2503 = vst.msk [vmem:[%s365 + $0xc8] sm:$0xff] %vm1286, %v2407
      %2504 = vst.msk [vmem:[%s365 + $0xd0] sm:$0xff] %vm1286, %v2408
      %2505 = vst.msk [vmem:[%s365 + $0xd8] sm:$0xff] %vm1286, %v2409
      %2506 = vst.msk [vmem:[%s365 + $0xe0] sm:$0xff] %vm1286, %v2410
      %2507 = vst.msk [vmem:[%s365 + $0xe8] sm:$0xff] %vm1286, %v2411
      %2508 = vst.msk [vmem:[%s365 + $0xf0] sm:$0xff] %vm1286, %v2412
      %2509 = vst.msk [vmem:[%s365 + $0xf8] sm:$0xff] %vm1286, %v2413
      %p2510 = scmp.lt.s32.totalorder %s21, 1
      %s2511 = scalar_select %p2510, %s21, 1
      %s2512 = smul.addr %s2511, 32
      %s2513 = smul.addr %s2512, 8
      %s2514 = scalar_lea.vmem %s8, %s2513
      %p2515 = scmp.lt.s32.totalorder %s21, 1
      %s2516 = scalar_select %p2515, %s21, 1
      %s2517 = smul.addr %s2516, 32
      %s2518 = smul.addr %s2517, 8
      %s2519 = scalar_lea.vmem %s9, %s2518
      // Predicated region
      $region53: #{tpu_custom_call.1} parent=51 // pred_check
        %p2520 = pneg %p217
      $region54: #{tpu_custom_call.1} parent=51 // pred_check_branch
        %2522 = sbr.rel (%p2520) target = $region56
      $region55: #{tpu_custom_call.1} parent=51 // pred_region
        _
      $region56: #{tpu_custom_call.1} parent=51 // pred_fallthru
        _
      // Predicated region
      $region57: #{tpu_custom_call.1} parent=51 // pred_check
        %p2523 = pneg %p243
      $region58: #{tpu_custom_call.1} parent=51 // pred_check_branch
        %2525 = sbr.rel (%p2523) target = $region60
      $region59: #{tpu_custom_call.1} parent=51 // pred_region
        _
      $region60: #{tpu_custom_call.1} parent=51 // pred_fallthru
        _
    $region52: #{tpu_custom_call.1} parent=5 // pred_fallthru
      _
    %p2526 = scmp.le.s32.totalorder 2, %s16
    // Predicated region
    $region61: #{tpu_custom_call.1} parent=5 // pred_check
      %p2527 = pneg %p2526
    $region62: #{tpu_custom_call.1} parent=5 // pred_check_branch
      %2529 = sbr.rel (%p2527) target = $region64
    $region63: #{tpu_custom_call.1} parent=5 // pred_region
      %s2530 = ssub.s32 %s16, 2
      // Predicated region
      $region65: #{tpu_custom_call.1} parent=63 // pred_check
        %p2531 = pneg %p223
      $region66: #{tpu_custom_call.1} parent=63 // pred_check_branch
        %2533 = sbr.rel (%p2531) target = $region68
      $region67: #{tpu_custom_call.1} parent=63 // pred_region
        %p2534 = scmp.lt.s32.totalorder %s22, 1
        %s2535 = scalar_select %p2534, %s22, 1
        %s2536 = smul.addr %s2535, 32
        %s2537 = smul.addr %s2536, 8
        %s2538 = scalar_lea.vmem %s8, %s2537
      $region68: #{tpu_custom_call.1} parent=63 // pred_fallthru
        _
      // Predicated region
      $region69: #{tpu_custom_call.1} parent=63 // pred_check
        %p2539 = pneg %p249
      $region70: #{tpu_custom_call.1} parent=63 // pred_check_branch
        %2541 = sbr.rel (%p2539) target = $region72
      $region71: #{tpu_custom_call.1} parent=63 // pred_region
        %p2542 = scmp.lt.s32.totalorder %s22, 1
        %s2543 = scalar_select %p2542, %s22, 1
        %s2544 = smul.addr %s2543, 32
        %s2545 = smul.addr %s2544, 8
        %s2546 = scalar_lea.vmem %s9, %s2545
      $region72: #{tpu_custom_call.1} parent=63 // pred_fallthru
        _
    $region64: #{tpu_custom_call.1} parent=5 // pred_fallthru
      _
  $region6: #{tpu_custom_call.1} parent=0 // loop_footer
    %s20 = sadd.s32 1, %s16
  $region7: #{tpu_custom_call.1} parent=0 // loop_footer_branch
    %15 = sbr.rel target = $region3
  $region8: #{tpu_custom_call.1} parent=0 // loop_exit
    _

</llo_original>
